<compile_context>
chip_gen: v6e
topology: v6e:2x2x1
jax: 0.10.0
libtpu: 0.0.40
codegen_flags: <defaults>
</compile_context>

<pallas_src>
import jax
import jax.numpy as jnp
from jax import lax
from jax.experimental import pallas as pl
from jax.experimental.pallas import tpu as pltpu


def output_head_kernel(patches_ref, w1_ref, w2_ref, sp_ref,
                       fw1a_ref, fw1b_ref, fw2_ref, fw3_ref, fw4_ref,
                       biases_ref, out_ref, acc_ref):
    k = pl.program_id(0)

    @pl.when(k == 0)
    def _():
        acc_ref[...] = jnp.zeros_like(acc_ref)

    # conv1 partial: one (4B, tk) @ (tk, 128) bf16 matmul per K-chunk, f32 acc.
    acc_ref[...] += jnp.dot(patches_ref[...], w1_ref[...],
                            preferred_element_type=jnp.float32)

    @pl.when(k == pl.num_programs(0) - 1)
    def _():
        four_b = acc_ref.shape[0]
        bsz = four_b // 4
        out_size = out_ref.shape[1]

        b1 = biases_ref[0:1, :]                       # conv1 bias (BN folded)
        b2 = biases_ref[1:2, :]                       # conv2 bias
        fb1 = biases_ref[2:3, :]
        fb2 = biases_ref[3:4, 0:64]
        fb3 = biases_ref[4:5, 0:32]
        fb4 = biases_ref[5:6, 0:out_size]

        # ConvNormAct epilogue: bias + ReLU -> (4B, 128) f32
        h = jnp.maximum(acc_ref[...] + b1, 0.0)

        # conv2 (2x2 on the 2x2 map -> 1x1): sum over the 4 positions.
        # Patch rows are position-major, so rows p*B:(p+1)*B hold position p.
        c = jnp.zeros((bsz, 128), jnp.float32)
        for p in range(4):  # static unroll, tiny
            c = c + jnp.dot(h[p * bsz:(p + 1) * bsz, :].astype(jnp.bfloat16),
                            w2_ref[p * 128:(p + 1) * 128, :],
                            preferred_element_type=jnp.float32)
        y = jnp.maximum(c + b2, 0.0)                  # == Flatten of (B,128,1,1)

        # fc1: Linear(133,128) split into conv-feature part (bf16) and spacial
        # part (f32, the /10 scaling is already folded into fw1b's rows).
        f = (jnp.dot(y.astype(jnp.bfloat16), fw1a_ref[...],
                     preferred_element_type=jnp.float32)
             + jnp.dot(sp_ref[...], fw1b_ref[...],
                       preferred_element_type=jnp.float32)
             + fb1)
        f = jnp.maximum(f, 0.0)
        f = jnp.maximum(jnp.dot(f.astype(jnp.bfloat16), fw2_ref[...],
                                preferred_element_type=jnp.float32) + fb2, 0.0)
        f = jnp.maximum(jnp.dot(f.astype(jnp.bfloat16), fw3_ref[...],
                                preferred_element_type=jnp.float32) + fb3, 0.0)
        out_ref[...] = (jnp.dot(f.astype(jnp.bfloat16), fw4_ref[...],
                                preferred_element_type=jnp.float32) + fb4)


def output_head(x, spacial_features, params, out_size, *, tk=1152):
    B, C, H, W = x.shape
    assert (C, H, W) == (512, 4, 4)
    K = C * 9
    assert K % tk == 0

    # --- glue: im2col for conv1 (3x3, stride 2, pad 1) -> 2x2 output positions,
    # stacked position-major into one (4B, 4608) slab (row = p*B + b). ---
    xp = jnp.pad(x, ((0, 0), (0, 0), (1, 1), (1, 1)))
    pats = []
    for oh in range(2):
        for ow in range(2):
            pats.append(xp[:, :, oh * 2:oh * 2 + 3, ow * 2:ow * 2 + 3].reshape(B, -1))
    patches = jnp.concatenate(pats, axis=0).astype(jnp.bfloat16)            # (4B,4608)

    # --- glue: fold eval-mode BatchNorm into conv1, then cast the weight to bf16 ---
    s = params['bn_gamma'] / jnp.sqrt(params['bn_var'] + 1e-5)
    t = params['bn_beta'] - params['bn_mean'] * s
    w1 = (params['conv1_w'] * s[:, None, None, None]).reshape(128, -1).T    # (4608,128)
    w1 = w1.astype(jnp.bfloat16)
    b1 = params['conv1_b'] * s + t                                          # (128,)

    # conv2 weight (O,I,2,2) -> position-major (512,128): row = p*128 + cin
    w2 = jnp.transpose(params['conv2_w'], (2, 3, 1, 0)).reshape(512, 128)
    w2 = w2.astype(jnp.bfloat16)

    # fc1: Linear(133,128) split; fold the spacial /10 scaling into its 5 rows.
    sp_scale = jnp.array([0.1, 0.1, 0.1, 1.0, 0.1], jnp.float32)
    fw1 = params['fc1_w'].T                                                 # (133,128)
    fw1a = fw1[:128].astype(jnp.bfloat16)                                   # (128,128)
    fw1b = fw1[128:] * sp_scale[:, None]                                    # (5,128) f32
    fw2 = params['fc2_w'].T.astype(jnp.bfloat16)                            # (128,64)
    fw3 = params['fc3_w'].T.astype(jnp.bfloat16)                            # (64,32)
    fw4 = params['fc4_w'].T.astype(jnp.bfloat16)                            # (32,out)

    # All biases packed into one (6, 128) f32 array (short rows zero-padded).
    biases = jnp.zeros((6, 128), jnp.float32)
    biases = biases.at[0, :].set(b1)
    biases = biases.at[1, :].set(params['conv2_b'])
    biases = biases.at[2, :].set(params['fc1_b'])
    biases = biases.at[3, :64].set(params['fc2_b'])
    biases = biases.at[4, :32].set(params['fc3_b'])
    biases = biases.at[5, :out_size].set(params['fc4_b'])

    full = lambda shape: pl.BlockSpec(shape, lambda k: (0, 0))
    grid_spec = pltpu.PrefetchScalarGridSpec(
        num_scalar_prefetch=0,
        grid=(K // tk,),                                   # chunk conv1's K dim
        in_specs=[
            pl.BlockSpec((4 * B, tk), lambda k: (0, k)),   # patches (K-sliced)
            pl.BlockSpec((tk, 128), lambda k: (k, 0)),     # w1      (K-sliced)
            full((512, 128)),                              # w2        (resident)
            full((B, 5)),                                  # spacial features
            full((128, 128)),                              # fw1a
            full((5, 128)),                                # fw1b (scale folded)
            full((128, 64)),                               # fw2
            full((64, 32)),                                # fw3
            full((32, out_size)),                          # fw4
            full((6, 128)),                                # packed biases
        ],
        out_specs=pl.BlockSpec((B, out_size), lambda k: (0, 0)),
        scratch_shapes=[pltpu.VMEM((4 * B, 128), jnp.float32)],
    )
    # NOTE: for large batches on v7x, add a leading "parallel" batch grid axis
    # (keep w1's index_map independent of it) and re-derive tiles for 64 MiB VMEM.
    return pl.pallas_call(
        output_head_kernel,
        out_shape=jax.ShapeDtypeStruct((B, out_size), jnp.float32),
        grid_spec=grid_spec,
        compiler_params=pltpu.CompilerParams(
            dimension_semantics=("arbitrary",)),
    )(patches, w1, w2, spacial_features, fw1a, fw1b, fw2, fw3, fw4, biases)


def ref_forward(x, sp, params):
    """Pure-JAX f32 reference matching the PyTorch forward."""
    y = lax.conv_general_dilated(x, params['conv1_w'], (2, 2), ((1, 1), (1, 1)),
                                 dimension_numbers=('NCHW', 'OIHW', 'NCHW'))
    y = y + params['conv1_b'][None, :, None, None]
    s = params['bn_gamma'] / jnp.sqrt(params['bn_var'] + 1e-5)
    t = params['bn_beta'] - params['bn_mean'] * s
    y = jnp.maximum(y * s[None, :, None, None] + t[None, :, None, None], 0.0)
    y = lax.conv_general_dilated(y, params['conv2_w'], (1, 1), ((0, 0), (0, 0)),
                                 dimension_numbers=('NCHW', 'OIHW', 'NCHW'))
    y = jnp.maximum(y + params['conv2_b'][None, :, None, None], 0.0)
    y = y.reshape(x.shape[0], -1)
    sp = sp * jnp.array([0.1, 0.1, 0.1, 1.0, 0.1], jnp.float32)
    z = jnp.concatenate([y, sp], axis=1)
    z = jnp.maximum(z @ params['fc1_w'].T + params['fc1_b'], 0.0)
    z = jnp.maximum(z @ params['fc2_w'].T + params['fc2_b'], 0.0)
    z = jnp.maximum(z @ params['fc3_w'].T + params['fc3_b'], 0.0)
    return z @ params['fc4_w'].T + params['fc4_b']


if __name__ == "__main__":
    out_size = 6
    key = jax.random.PRNGKey(0)
    ks = jax.random.split(key, 16)

    def init(k, shape, scale=0.05):
        return jax.random.normal(k, shape, jnp.float32) * scale

    params = {
        'conv1_w': init(ks[0], (128, 512, 3, 3), 0.02),
        'conv1_b': init(ks[1], (128,)),
        'bn_gamma': jnp.ones((128,), jnp.float32),
        'bn_beta': jnp.zeros((128,), jnp.float32),
        'bn_mean': jnp.zeros((128,), jnp.float32),
        'bn_var': jnp.ones((128,), jnp.float32),
        'conv2_w': init(ks[2], (128, 128, 2, 2), 0.03),
        'conv2_b': init(ks[3], (128,)),
        'fc1_w': init(ks[4], (128, 133)), 'fc1_b': init(ks[5], (128,)),
        'fc2_w': init(ks[6], (64, 128)),  'fc2_b': init(ks[7], (64,)),
        'fc3_w': init(ks[8], (32, 64)),   'fc3_b': init(ks[9], (32,)),
        'fc4_w': init(ks[10], (out_size, 32)), 'fc4_b': init(ks[11], (out_size,)),
    }

    x = jax.random.normal(ks[12], (2, 512, 4, 4), jnp.float32)
    spacial = jax.random.normal(ks[13], (2, 5), jnp.float32) * 5.0

    out = output_head(x, spacial, params, out_size)
    out = jax.block_until_ready(out)

    ref = jax.block_until_ready(ref_forward(x, spacial, params))
    assert out.shape == (2, out_size)
    # bf16 weights/activations on the matmul path -> loosened tolerance vs f32 ref.
    assert jnp.allclose(out, ref, atol=2e-2, rtol=2e-2), (out, ref)
    print("KERNEL_OK")
</pallas_src>

<mosaic_0001>
module attributes {stable_mosaic.version = 11 : i64} {
  func.func @output_head_kernel(%arg0: i32, %arg1: memref<8x1152xbf16, #tpu.memory_space<vmem>>, %arg2: memref<1152x128xbf16, #tpu.memory_space<vmem>>, %arg3: memref<512x128xbf16, #tpu.memory_space<vmem>>, %arg4: memref<2x5xf32, #tpu.memory_space<vmem>>, %arg5: memref<128x128xbf16, #tpu.memory_space<vmem>>, %arg6: memref<5x128xf32, #tpu.memory_space<vmem>>, %arg7: memref<128x64xbf16, #tpu.memory_space<vmem>>, %arg8: memref<64x32xbf16, #tpu.memory_space<vmem>>, %arg9: memref<32x6xbf16, #tpu.memory_space<vmem>>, %arg10: memref<6x128xf32, #tpu.memory_space<vmem>>, %arg11: memref<2x6xf32, #tpu.memory_space<vmem>>, %arg12: memref<8x128xf32, #tpu.memory_space<vmem>>) attributes {dimension_semantics = [#tpu.dimension_semantics<arbitrary>], iteration_bounds = array<i64: 4>, scalar_prefetch = 0 : i64, scratch_operands = 1 : i64, tpu.core_type = #tpu.core_type<tc>, window_params = [{transform_indices = @transform_0, window_bounds = array<i64: 8, 1152>}, {transform_indices = @transform_1, window_bounds = array<i64: 1152, 128>}, {pipeline_mode = #tpu.pipeline_mode<synchronous>, transform_indices = @transform_2, window_bounds = array<i64: 512, 128>}, {pipeline_mode = #tpu.pipeline_mode<synchronous>, transform_indices = @transform_3, window_bounds = array<i64: 2, 5>}, {pipeline_mode = #tpu.pipeline_mode<synchronous>, transform_indices = @transform_4, window_bounds = array<i64: 128, 128>}, {pipeline_mode = #tpu.pipeline_mode<synchronous>, transform_indices = @transform_5, window_bounds = array<i64: 5, 128>}, {pipeline_mode = #tpu.pipeline_mode<synchronous>, transform_indices = @transform_6, window_bounds = array<i64: 128, 64>}, {pipeline_mode = #tpu.pipeline_mode<synchronous>, transform_indices = @transform_7, window_bounds = array<i64: 64, 32>}, {pipeline_mode = #tpu.pipeline_mode<synchronous>, transform_indices = @transform_8, window_bounds = array<i64: 32, 6>}, {pipeline_mode = #tpu.pipeline_mode<synchronous>, transform_indices = @transform_9, window_bounds = array<i64: 6, 128>}, {pipeline_mode = #tpu.pipeline_mode<synchronous>, transform_indices = @transform_10, window_bounds = array<i64: 2, 6>}]} {
    %c0_i32 = arith.constant 0 : i32
    %0 = arith.cmpi eq, %arg0, %c0_i32 : i32
    %1 = arith.extui %0 : i1 to i32
    %c0_i32_0 = arith.constant 0 : i32
    %2 = arith.cmpi ne, %1, %c0_i32_0 : i32
    scf.if %2 {
      %cst_9 = arith.constant 0.000000e+00 : f32
      %12 = vector.broadcast %cst_9 : f32 to vector<8x128xf32>
      %c0_10 = arith.constant 0 : index
      %c0_11 = arith.constant 0 : index
      %13 = vector.load %arg12[%c0_10, %c0_11] : memref<8x128xf32, #tpu.memory_space<vmem>>, vector<8x128xf32>
      tpu.vector_store %arg12[%c0_10, %c0_11], %12 {strides = array<i32>} : memref<8x128xf32, #tpu.memory_space<vmem>>, vector<8x128xf32>,
    } else {
    }
    %c0 = arith.constant 0 : index
    %c0_1 = arith.constant 0 : index
    %3 = vector.load %arg12[%c0, %c0_1] : memref<8x128xf32, #tpu.memory_space<vmem>>, vector<8x128xf32>
    %c0_2 = arith.constant 0 : index
    %c0_3 = arith.constant 0 : index
    %4 = vector.load %arg1[%c0_2, %c0_3] : memref<8x1152xbf16, #tpu.memory_space<vmem>>, vector<8x1152xbf16>
    %c0_4 = arith.constant 0 : index
    %c0_5 = arith.constant 0 : index
    %5 = vector.load %arg2[%c0_4, %c0_5] : memref<1152x128xbf16, #tpu.memory_space<vmem>>, vector<1152x128xbf16>
    %cst = arith.constant dense<0.000000e+00> : vector<8x128xf32>
    %6 = tpu.matmul %4, %5, %cst {dimension_numbers = #tpu.dot_dimension_numbers<[1], [0], [0], [1], [0, 0, 1, 1], [], []>} : vector<8x1152xbf16>, vector<1152x128xbf16>, vector<8x128xf32> -> vector<8x128xf32>
    %7 = arith.addf %3, %6 : vector<8x128xf32>
    %c0_6 = arith.constant 0 : index
    %c0_7 = arith.constant 0 : index
    %8 = vector.load %arg12[%c0_6, %c0_7] : memref<8x128xf32, #tpu.memory_space<vmem>>, vector<8x128xf32>
    tpu.vector_store %arg12[%c0_6, %c0_7], %7 {strides = array<i32>} : memref<8x128xf32, #tpu.memory_space<vmem>>, vector<8x128xf32>,
    %c3_i32 = arith.constant 3 : i32
    %9 = arith.cmpi eq, %arg0, %c3_i32 : i32
    %10 = arith.extui %9 : i1 to i32
    %c0_i32_8 = arith.constant 0 : i32
    %11 = arith.cmpi ne, %10, %c0_i32_8 : i32
    scf.if %11 {
      %c0_9 = arith.constant 0 : index
      %c0_10 = arith.constant 0 : index
      %12 = vector.load %arg10[%c0_9, %c0_10] : memref<6x128xf32, #tpu.memory_space<vmem>>, vector<1x128xf32>
      %c1 = arith.constant 1 : index
      %c0_11 = arith.constant 0 : index
      %13 = vector.load %arg10[%c1, %c0_11] : memref<6x128xf32, #tpu.memory_space<vmem>>, vector<1x128xf32>
      %c2 = arith.constant 2 : index
      %c0_12 = arith.constant 0 : index
      %14 = vector.load %arg10[%c2, %c0_12] : memref<6x128xf32, #tpu.memory_space<vmem>>, vector<1x128xf32>
      %c3 = arith.constant 3 : index
      %c0_13 = arith.constant 0 : index
      %15 = vector.load %arg10[%c3, %c0_13] : memref<6x128xf32, #tpu.memory_space<vmem>>, vector<1x64xf32>
      %c4 = arith.constant 4 : index
      %c0_14 = arith.constant 0 : index
      %16 = vector.load %arg10[%c4, %c0_14] : memref<6x128xf32, #tpu.memory_space<vmem>>, vector<1x32xf32>
      %c5 = arith.constant 5 : index
      %c0_15 = arith.constant 0 : index
      %17 = vector.load %arg10[%c5, %c0_15] : memref<6x128xf32, #tpu.memory_space<vmem>>, vector<1x6xf32>
      %c0_16 = arith.constant 0 : index
      %c0_17 = arith.constant 0 : index
      %18 = vector.load %arg12[%c0_16, %c0_17] : memref<8x128xf32, #tpu.memory_space<vmem>>, vector<8x128xf32>
      %19 = vector.broadcast %12 : vector<1x128xf32> to vector<8x128xf32>
      %20 = arith.addf %18, %19 : vector<8x128xf32>
      %cst_18 = arith.constant 0.000000e+00 : f32
      %21 = vector.broadcast %cst_18 : f32 to vector<8x128xf32>
      %22 = arith.maximumf %20, %21 : vector<8x128xf32>
      %cst_19 = arith.constant 0.000000e+00 : f32
      %23 = vector.broadcast %cst_19 : f32 to vector<2x128xf32>
      %24 = vector.extract_strided_slice %22 {offsets = [0, 0], sizes = [2, 128], strides = [1, 1]} : vector<8x128xf32> to vector<2x128xf32>
      %25 = arith.truncf %24 : vector<2x128xf32> to vector<2x128xbf16>
      %c0_20 = arith.constant 0 : index
      %c0_21 = arith.constant 0 : index
      %26 = vector.load %arg3[%c0_20, %c0_21] : memref<512x128xbf16, #tpu.memory_space<vmem>>, vector<128x128xbf16>
      %cst_22 = arith.constant dense<0.000000e+00> : vector<2x128xf32>
      %27 = tpu.matmul %25, %26, %cst_22 {dimension_numbers = #tpu.dot_dimension_numbers<[1], [0], [0], [1], [0, 0, 1, 1], [], []>} : vector<2x128xbf16>, vector<128x128xbf16>, vector<2x128xf32> -> vector<2x128xf32>
      %28 = arith.addf %23, %27 : vector<2x128xf32>
      %29 = vector.extract_strided_slice %22 {offsets = [2, 0], sizes = [2, 128], strides = [1, 1]} : vector<8x128xf32> to vector<2x128xf32>
      %30 = arith.truncf %29 : vector<2x128xf32> to vector<2x128xbf16>
      %c128 = arith.constant 128 : index
      %c0_23 = arith.constant 0 : index
      %31 = vector.load %arg3[%c128, %c0_23] : memref<512x128xbf16, #tpu.memory_space<vmem>>, vector<128x128xbf16>
      %cst_24 = arith.constant dense<0.000000e+00> : vector<2x128xf32>
      %32 = tpu.matmul %30, %31, %cst_24 {dimension_numbers = #tpu.dot_dimension_numbers<[1], [0], [0], [1], [0, 0, 1, 1], [], []>} : vector<2x128xbf16>, vector<128x128xbf16>, vector<2x128xf32> -> vector<2x128xf32>
      %33 = arith.addf %28, %32 : vector<2x128xf32>
      %34 = vector.extract_strided_slice %22 {offsets = [4, 0], sizes = [2, 128], strides = [1, 1]} : vector<8x128xf32> to vector<2x128xf32>
      %35 = arith.truncf %34 : vector<2x128xf32> to vector<2x128xbf16>
      %c256 = arith.constant 256 : index
      %c0_25 = arith.constant 0 : index
      %36 = vector.load %arg3[%c256, %c0_25] : memref<512x128xbf16, #tpu.memory_space<vmem>>, vector<128x128xbf16>
      %cst_26 = arith.constant dense<0.000000e+00> : vector<2x128xf32>
      %37 = tpu.matmul %35, %36, %cst_26 {dimension_numbers = #tpu.dot_dimension_numbers<[1], [0], [0], [1], [0, 0, 1, 1], [], []>} : vector<2x128xbf16>, vector<128x128xbf16>, vector<2x128xf32> -> vector<2x128xf32>
      %38 = arith.addf %33, %37 : vector<2x128xf32>
      %39 = vector.extract_strided_slice %22 {offsets = [6, 0], sizes = [2, 128], strides = [1, 1]} : vector<8x128xf32> to vector<2x128xf32>
      %40 = arith.truncf %39 : vector<2x128xf32> to vector<2x128xbf16>
      %c384 = arith.constant 384 : index
      %c0_27 = arith.constant 0 : index
      %41 = vector.load %arg3[%c384, %c0_27] : memref<512x128xbf16, #tpu.memory_space<vmem>>, vector<128x128xbf16>
      %cst_28 = arith.constant dense<0.000000e+00> : vector<2x128xf32>
      %42 = tpu.matmul %40, %41, %cst_28 {dimension_numbers = #tpu.dot_dimension_numbers<[1], [0], [0], [1], [0, 0, 1, 1], [], []>} : vector<2x128xbf16>, vector<128x128xbf16>, vector<2x128xf32> -> vector<2x128xf32>
      %43 = arith.addf %38, %42 : vector<2x128xf32>
      %44 = vector.broadcast %13 : vector<1x128xf32> to vector<2x128xf32>
      %45 = arith.addf %43, %44 : vector<2x128xf32>
      %cst_29 = arith.constant 0.000000e+00 : f32
      %46 = vector.broadcast %cst_29 : f32 to vector<2x128xf32>
      %47 = arith.maximumf %45, %46 : vector<2x128xf32>
      %48 = arith.truncf %47 : vector<2x128xf32> to vector<2x128xbf16>
      %c0_30 = arith.constant 0 : index
      %c0_31 = arith.constant 0 : index
      %49 = vector.load %arg5[%c0_30, %c0_31] : memref<128x128xbf16, #tpu.memory_space<vmem>>, vector<128x128xbf16>
      %cst_32 = arith.constant dense<0.000000e+00> : vector<2x128xf32>
      %50 = tpu.matmul %48, %49, %cst_32 {dimension_numbers = #tpu.dot_dimension_numbers<[1], [0], [0], [1], [0, 0, 1, 1], [], []>} : vector<2x128xbf16>, vector<128x128xbf16>, vector<2x128xf32> -> vector<2x128xf32>
      %c0_33 = arith.constant 0 : index
      %c0_34 = arith.constant 0 : index
      %51 = vector.load %arg4[%c0_33, %c0_34] : memref<2x5xf32, #tpu.memory_space<vmem>>, vector<2x5xf32>
      %c0_35 = arith.constant 0 : index
      %c0_36 = arith.constant 0 : index
      %52 = vector.load %arg6[%c0_35, %c0_36] : memref<5x128xf32, #tpu.memory_space<vmem>>, vector<5x128xf32>
      %cst_37 = arith.constant dense<0.000000e+00> : vector<2x128xf32>
      %53 = tpu.matmul %51, %52, %cst_37 {dimension_numbers = #tpu.dot_dimension_numbers<[1], [0], [0], [1], [0, 0, 1, 1], [], []>} : vector<2x5xf32>, vector<5x128xf32>, vector<2x128xf32> -> vector<2x128xf32>
      %54 = arith.addf %50, %53 : vector<2x128xf32>
      %55 = vector.broadcast %14 : vector<1x128xf32> to vector<2x128xf32>
      %56 = arith.addf %54, %55 : vector<2x128xf32>
      %cst_38 = arith.constant 0.000000e+00 : f32
      %57 = vector.broadcast %cst_38 : f32 to vector<2x128xf32>
      %58 = arith.maximumf %56, %57 : vector<2x128xf32>
      %59 = arith.truncf %58 : vector<2x128xf32> to vector<2x128xbf16>
      %c0_39 = arith.constant 0 : index
      %c0_40 = arith.constant 0 : index
      %60 = vector.load %arg7[%c0_39, %c0_40] : memref<128x64xbf16, #tpu.memory_space<vmem>>, vector<128x64xbf16>
      %cst_41 = arith.constant dense<0.000000e+00> : vector<2x64xf32>
      %61 = tpu.matmul %59, %60, %cst_41 {dimension_numbers = #tpu.dot_dimension_numbers<[1], [0], [0], [1], [0, 0, 1, 1], [], []>} : vector<2x128xbf16>, vector<128x64xbf16>, vector<2x64xf32> -> vector<2x64xf32>
      %62 = vector.broadcast %15 : vector<1x64xf32> to vector<2x64xf32>
      %63 = arith.addf %61, %62 : vector<2x64xf32>
      %cst_42 = arith.constant 0.000000e+00 : f32
      %64 = vector.broadcast %cst_42 : f32 to vector<2x64xf32>
      %65 = arith.maximumf %63, %64 : vector<2x64xf32>
      %66 = arith.truncf %65 : vector<2x64xf32> to vector<2x64xbf16>
      %c0_43 = arith.constant 0 : index
      %c0_44 = arith.constant 0 : index
      %67 = vector.load %arg8[%c0_43, %c0_44] : memref<64x32xbf16, #tpu.memory_space<vmem>>, vector<64x32xbf16>
      %cst_45 = arith.constant dense<0.000000e+00> : vector<2x32xf32>
      %68 = tpu.matmul %66, %67, %cst_45 {dimension_numbers = #tpu.dot_dimension_numbers<[1], [0], [0], [1], [0, 0, 1, 1], [], []>} : vector<2x64xbf16>, vector<64x32xbf16>, vector<2x32xf32> -> vector<2x32xf32>
      %69 = vector.broadcast %16 : vector<1x32xf32> to vector<2x32xf32>
      %70 = arith.addf %68, %69 : vector<2x32xf32>
      %cst_46 = arith.constant 0.000000e+00 : f32
      %71 = vector.broadcast %cst_46 : f32 to vector<2x32xf32>
      %72 = arith.maximumf %70, %71 : vector<2x32xf32>
      %73 = arith.truncf %72 : vector<2x32xf32> to vector<2x32xbf16>
      %c0_47 = arith.constant 0 : index
      %c0_48 = arith.constant 0 : index
      %74 = vector.load %arg9[%c0_47, %c0_48] : memref<32x6xbf16, #tpu.memory_space<vmem>>, vector<32x6xbf16>
      %cst_49 = arith.constant dense<0.000000e+00> : vector<2x6xf32>
      %75 = tpu.matmul %73, %74, %cst_49 {dimension_numbers = #tpu.dot_dimension_numbers<[1], [0], [0], [1], [0, 0, 1, 1], [], []>} : vector<2x32xbf16>, vector<32x6xbf16>, vector<2x6xf32> -> vector<2x6xf32>
      %76 = vector.broadcast %17 : vector<1x6xf32> to vector<2x6xf32>
      %77 = arith.addf %75, %76 : vector<2x6xf32>
      %c0_50 = arith.constant 0 : index
      %c0_51 = arith.constant 0 : index
      %78 = vector.load %arg11[%c0_50, %c0_51] : memref<2x6xf32, #tpu.memory_space<vmem>>, vector<2x6xf32>
      tpu.vector_store %arg11[%c0_50, %c0_51], %77 {strides = array<i32>} : memref<2x6xf32, #tpu.memory_space<vmem>>, vector<2x6xf32>,
    } else {
    }
    return
  }
  func.func @transform_0(%arg0: i32) -> (i32, i32) {
    %c0_i32 = arith.constant 0 : i32
    %c0_i32_0 = arith.constant 0 : i32
    return %c0_i32, %arg0 : i32, i32
  }
  func.func @transform_1(%arg0: i32) -> (i32, i32) {
    %c0_i32 = arith.constant 0 : i32
    %c0_i32_0 = arith.constant 0 : i32
    return %arg0, %c0_i32 : i32, i32
  }
  func.func @transform_2(%arg0: i32) -> (i32, i32) {
    %c0_i32 = arith.constant 0 : i32
    %c0_i32_0 = arith.constant 0 : i32
    %c0_i32_1 = arith.constant 0 : i32
    return %c0_i32, %c0_i32_0 : i32, i32
  }
  func.func @transform_3(%arg0: i32) -> (i32, i32) {
    %c0_i32 = arith.constant 0 : i32
    %c0_i32_0 = arith.constant 0 : i32
    %c0_i32_1 = arith.constant 0 : i32
    return %c0_i32, %c0_i32_0 : i32, i32
  }
  func.func @transform_4(%arg0: i32) -> (i32, i32) {
    %c0_i32 = arith.constant 0 : i32
    %c0_i32_0 = arith.constant 0 : i32
    %c0_i32_1 = arith.constant 0 : i32
    return %c0_i32, %c0_i32_0 : i32, i32
  }
  func.func @transform_5(%arg0: i32) -> (i32, i32) {
    %c0_i32 = arith.constant 0 : i32
    %c0_i32_0 = arith.constant 0 : i32
    %c0_i32_1 = arith.constant 0 : i32
    return %c0_i32, %c0_i32_0 : i32, i32
  }
  func.func @transform_6(%arg0: i32) -> (i32, i32) {
    %c0_i32 = arith.constant 0 : i32
    %c0_i32_0 = arith.constant 0 : i32
    %c0_i32_1 = arith.constant 0 : i32
    return %c0_i32, %c0_i32_0 : i32, i32
  }
  func.func @transform_7(%arg0: i32) -> (i32, i32) {
    %c0_i32 = arith.constant 0 : i32
    %c0_i32_0 = arith.constant 0 : i32
    %c0_i32_1 = arith.constant 0 : i32
    return %c0_i32, %c0_i32_0 : i32, i32
  }
  func.func @transform_8(%arg0: i32) -> (i32, i32) {
    %c0_i32 = arith.constant 0 : i32
    %c0_i32_0 = arith.constant 0 : i32
    %c0_i32_1 = arith.constant 0 : i32
    return %c0_i32, %c0_i32_0 : i32, i32
  }
  func.func @transform_9(%arg0: i32) -> (i32, i32) {
    %c0_i32 = arith.constant 0 : i32
    %c0_i32_0 = arith.constant 0 : i32
    %c0_i32_1 = arith.constant 0 : i32
    return %c0_i32, %c0_i32_0 : i32, i32
  }
  func.func @transform_10(%arg0: i32) -> (i32, i32) {
    %c0_i32 = arith.constant 0 : i32
    %c0_i32_0 = arith.constant 0 : i32
    %c0_i32_1 = arith.constant 0 : i32
    return %c0_i32, %c0_i32_0 : i32, i32
  }
}

</mosaic_0001>

<llo_original>
// kernel: tpu_custom_call.1
$region0: #{tpu_custom_call.1}
  #allocation0 [shape = 'u32[]', space=smem, size = 0x4, offset = 0x4, fixed_abs, tag = 'smem constant byte address 0x4 - core index']
  #allocation1 [shape = 'u32[144,128]{1,0:T(1,128)}', space=vmem, size = 0x12000, scoped, tag = 'internal scratch']
  #allocation2 [shape = 'f32[8,128]{1,0:T(8,128)}', space=vmem, size = 0x1000, scoped, tag = 'scratch operand']
  %s0 = inlined_call_operand.hbm [shape: bf16[8,4608], index: 0, kind: input, shape index: {}]
  %s1 = inlined_call_operand.hbm [shape: bf16[4608,128], index: 1, kind: input, shape index: {}]
  %s2 = inlined_call_operand.hbm [shape: bf16[512,128], index: 2, kind: input, shape index: {}]
  %s3 = inlined_call_operand.hbm [shape: f32[2,5], index: 3, kind: input, shape index: {}]
  %s4 = inlined_call_operand.hbm [shape: bf16[128,128], index: 4, kind: input, shape index: {}]
  %s5 = inlined_call_operand.hbm [shape: f32[5,128], index: 5, kind: input, shape index: {}]
  %s6 = inlined_call_operand.vmem [shape: bf16[128,64], index: 6, kind: input, shape index: {}]
  %s7 = inlined_call_operand.vmem [shape: bf16[64,32], index: 7, kind: input, shape index: {}]
  %s8 = inlined_call_operand.vmem [shape: bf16[32,6], index: 8, kind: input, shape index: {}]
  %s9 = inlined_call_operand.hbm [shape: f32[6,128], index: 9, kind: input, shape index: {}]
  %s10 = inlined_call_operand.hbm [shape: f32[2,6], index: 10, kind: output, shape index: {}]
  %s11 = sld [smem:[#allocation0]]
  $region109: #{tpu_custom_call.1} parent=0
    _
  %s13 = ssub.s32 1, %s11
  %s14 = scalar_select 0, %s13, %s11
  $region1: #{tpu_custom_call.1} parent=0
    #allocation3 [shape = 'u8[36864]{0}', space=vmem, size = 0x9000, scoped, tag = 'input window, operand 0']
    #allocation4 [shape = 's32[2]{0}', space=sflag, size = 0x8, scoped, tag = 'scoped memory for tpu_custom_call.1']
    #allocation5 [shape = 's32[2]{0}', space=sflag, size = 0x8, scoped, tag = 'scoped memory for tpu_custom_call.1']
    #allocation6 [shape = 'u8[589824]{0}', space=vmem, size = 0x90000, scoped, tag = 'input window, operand 1']
    #allocation7 [shape = 's32[2]{0}', space=sflag, size = 0x8, scoped, tag = 'scoped memory for tpu_custom_call.1']
    #allocation8 [shape = 'u8[131072]{0}', space=vmem, size = 0x20000, scoped, tag = 'input window, operand 2, single buffered']
    #allocation9 [shape = 'u8[1024]{0}', space=vmem, size = 0x400, scoped, tag = 'input window, operand 3, single buffered']
    #allocation10 [shape = 's32[1]{0}', space=sflag, size = 0x4, scoped, tag = 'scoped memory for tpu_custom_call.1']
    #allocation11 [shape = 'u8[32768]{0}', space=vmem, size = 0x8000, scoped, tag = 'input window, operand 4, single buffered']
    #allocation12 [shape = 'u8[4096]{0}', space=vmem, size = 0x1000, scoped, tag = 'input window, operand 5, single buffered']
    #allocation13 [shape = 's32[1]{0}', space=sflag, size = 0x4, scoped, tag = 'scoped memory for tpu_custom_call.1']
    #allocation14 [shape = 'u8[4096]{0}', space=vmem, size = 0x1000, scoped, tag = 'input window, operand 9, single buffered']
    #allocation15 [shape = 'u8[1024]{0}', space=vmem, size = 0x400, scoped, tag = 'output window, operand 0, single buffered']
    %15 = vsyncpa [#allocation4], 0
    %s16 = scalar_lea.sflag [#allocation4], 1
    %17 = vsyncpa %s16, 0
    %18 = vsyncpa [#allocation7], 0
    %s19 = scalar_lea.sflag [#allocation7], 1
    %20 = vsyncpa %s19, 0
    %21 = vsyncpa [#allocation10], 0
    %22 = vsyncpa [#allocation13], 0
    %23 = vsyncpa [#allocation5], 0
    loop: start=0, step=1, limit=6
    $region2: #{tpu_custom_call.1} parent=1 // loop_pre_header
      _
    $region3: #{tpu_custom_call.1} parent=1 // loop_header
      %s25 = sphi 0, %s29
      %p26 = scmp.ge.s32.totalorder %s25, 6
      %s35 = sphi 0, %s37
      %s38 = sphi 0, %s35
      %s39 = sphi 0, %s38
      %s55 = sphi 0, %s39
      %s61 = sphi 0, %s63
      %s64 = sphi 0, %s61
      %s65 = sphi 0, %s64
      %s81 = sphi 0, %s65
      %s85 = sphi 0, %s85
      %s87 = sphi 0, %s85
      %s88 = sphi 0, %s87
      %s102 = sphi 0, %s88
      %s106 = sphi 0, %s106
      %s108 = sphi 0, %s106
      %s109 = sphi 0, %s108
      %s123 = sphi 0, %s109
      %s127 = sphi 0, %s127
      %s129 = sphi 0, %s127
      %s130 = sphi 0, %s129
      %s144 = sphi 0, %s130
      %s148 = sphi 0, %s148
      %s150 = sphi 0, %s148
      %s151 = sphi 0, %s150
      %s165 = sphi 0, %s151
      %s169 = sphi 0, %s169
      %s171 = sphi 0, %s169
      %s172 = sphi 0, %s171
      %s186 = sphi 0, %s172
      %s190 = sphi 0, %s190
      %s192 = sphi 0, %s190
      %s193 = sphi 0, %s192
      %s207 = sphi 0, %s193
      %s211 = sphi 0, %s211
      %s213 = sphi 0, %s211
      %s214 = sphi 0, %s213
      %s228 = sphi 0, %s214
      %s232 = sphi 0, %s232
      %s234 = sphi 0, %s232
      %s235 = sphi 0, %s234
      %s249 = sphi 0, %s235
      %s253 = sphi 0, %s253
      %s255 = sphi 0, %s253
      %s256 = sphi 0, %s255
      %s270 = sphi 0, %s256
    $region4: #{tpu_custom_call.1} parent=1 // loop_header_branch
      %28 = sbr.rel (%p26) target = $region8
    $region5: #{tpu_custom_call.1} parent=1 // loop_body
      %s30 = ssub.s32 %s25, 1
      %s31 = ssub.s32 %s25, 2
      %s32 = sadd.s32 %s25, 1
      %s33 = ssub.s32 %s25, %s32
      %p34 = scmp.eq.s32.totalorder %s33, 0
      %s36 = sadd.s32 %s35, 1
      %s37 = scalar_select %p34, %s35, %s36
      %p40 = pneg %p34
      %p41 = scmp.eq.s32.totalorder %s25, 3
      %p42 = por %p40, %p41
      %p43 = scmp.ne.s32.totalorder %s35, %s38
      %p44 = scmp.eq.s32.totalorder %s25, 0
      %p45 = por %p43, %p44
      %p46 = scmp.ne.s32.totalorder %s35, %s38
      %p47 = scmp.eq.s32.totalorder %s30, 3
      %p48 = por %p46, %p47
      %p49 = scmp.ne.s32.totalorder %s38, %s39
      %p50 = scmp.eq.s32.totalorder %s30, 0
      %p51 = por %p49, %p50
      %p52 = scmp.ne.s32.totalorder %s38, %s39
      %p53 = scmp.eq.s32.totalorder %s31, 3
      %p54 = por %p52, %p53
      %p56 = scmp.ne.s32.totalorder %s39, %s55
      %p57 = scmp.eq.s32.totalorder %s31, 0
      %p58 = por %p56, %p57
      %s59 = ssub.s32 %s25, %s32
      %p60 = scmp.eq.s32.totalorder %s59, 0
      %s62 = sadd.s32 %s61, 1
      %s63 = scalar_select %p60, %s61, %s62
      %p66 = pneg %p60
      %p67 = scmp.eq.s32.totalorder %s25, 3
      %p68 = por %p66, %p67
      %p69 = scmp.ne.s32.totalorder %s61, %s64
      %p70 = scmp.eq.s32.totalorder %s25, 0
      %p71 = por %p69, %p70
      %p72 = scmp.ne.s32.totalorder %s61, %s64
      %p73 = scmp.eq.s32.totalorder %s30, 3
      %p74 = por %p72, %p73
      %p75 = scmp.ne.s32.totalorder %s64, %s65
      %p76 = scmp.eq.s32.totalorder %s30, 0
      %p77 = por %p75, %p76
      %p78 = scmp.ne.s32.totalorder %s64, %s65
      %p79 = scmp.eq.s32.totalorder %s31, 3
      %p80 = por %p78, %p79
      %p82 = scmp.ne.s32.totalorder %s65, %s81
      %p83 = scmp.eq.s32.totalorder %s31, 0
      %p84 = por %p82, %p83
      %s86 = sadd.s32 %s85, 1
      %p89 = scmp.eq.s32.totalorder %s25, 3
      %p90 = scmp.ne.s32.totalorder %s85, %s87
      %p91 = scmp.eq.s32.totalorder %s25, 0
      %p92 = por %p90, %p91
      %p93 = scmp.ne.s32.totalorder %s85, %s87
      %p94 = scmp.eq.s32.totalorder %s30, 3
      %p95 = por %p93, %p94
      %p96 = scmp.ne.s32.totalorder %s87, %s88
      %p97 = scmp.eq.s32.totalorder %s30, 0
      %p98 = por %p96, %p97
      %p99 = scmp.ne.s32.totalorder %s87, %s88
      %p100 = scmp.eq.s32.totalorder %s31, 3
      %p101 = por %p99, %p100
      %p103 = scmp.ne.s32.totalorder %s88, %s102
      %p104 = scmp.eq.s32.totalorder %s31, 0
      %p105 = por %p103, %p104
      %s107 = sadd.s32 %s106, 1
      %p110 = scmp.eq.s32.totalorder %s25, 3
      %p111 = scmp.ne.s32.totalorder %s106, %s108
      %p112 = scmp.eq.s32.totalorder %s25, 0
      %p113 = por %p111, %p112
      %p114 = scmp.ne.s32.totalorder %s106, %s108
      %p115 = scmp.eq.s32.totalorder %s30, 3
      %p116 = por %p114, %p115
      %p117 = scmp.ne.s32.totalorder %s108, %s109
      %p118 = scmp.eq.s32.totalorder %s30, 0
      %p119 = por %p117, %p118
      %p120 = scmp.ne.s32.totalorder %s108, %s109
      %p121 = scmp.eq.s32.totalorder %s31, 3
      %p122 = por %p120, %p121
      %p124 = scmp.ne.s32.totalorder %s109, %s123
      %p125 = scmp.eq.s32.totalorder %s31, 0
      %p126 = por %p124, %p125
      %s128 = sadd.s32 %s127, 1
      %p131 = scmp.eq.s32.totalorder %s25, 3
      %p132 = scmp.ne.s32.totalorder %s127, %s129
      %p133 = scmp.eq.s32.totalorder %s25, 0
      %p134 = por %p132, %p133
      %p135 = scmp.ne.s32.totalorder %s127, %s129
      %p136 = scmp.eq.s32.totalorder %s30, 3
      %p137 = por %p135, %p136
      %p138 = scmp.ne.s32.totalorder %s129, %s130
      %p139 = scmp.eq.s32.totalorder %s30, 0
      %p140 = por %p138, %p139
      %p141 = scmp.ne.s32.totalorder %s129, %s130
      %p142 = scmp.eq.s32.totalorder %s31, 3
      %p143 = por %p141, %p142
      %p145 = scmp.ne.s32.totalorder %s130, %s144
      %p146 = scmp.eq.s32.totalorder %s31, 0
      %p147 = por %p145, %p146
      %s149 = sadd.s32 %s148, 1
      %p152 = scmp.eq.s32.totalorder %s25, 3
      %p153 = scmp.ne.s32.totalorder %s148, %s150
      %p154 = scmp.eq.s32.totalorder %s25, 0
      %p155 = por %p153, %p154
      %p156 = scmp.ne.s32.totalorder %s148, %s150
      %p157 = scmp.eq.s32.totalorder %s30, 3
      %p158 = por %p156, %p157
      %p159 = scmp.ne.s32.totalorder %s150, %s151
      %p160 = scmp.eq.s32.totalorder %s30, 0
      %p161 = por %p159, %p160
      %p162 = scmp.ne.s32.totalorder %s150, %s151
      %p163 = scmp.eq.s32.totalorder %s31, 3
      %p164 = por %p162, %p163
      %p166 = scmp.ne.s32.totalorder %s151, %s165
      %p167 = scmp.eq.s32.totalorder %s31, 0
      %p168 = por %p166, %p167
      %s170 = sadd.s32 %s169, 1
      %p173 = scmp.eq.s32.totalorder %s25, 3
      %p174 = scmp.ne.s32.totalorder %s169, %s171
      %p175 = scmp.eq.s32.totalorder %s25, 0
      %p176 = por %p174, %p175
      %p177 = scmp.ne.s32.totalorder %s169, %s171
      %p178 = scmp.eq.s32.totalorder %s30, 3
      %p179 = por %p177, %p178
      %p180 = scmp.ne.s32.totalorder %s171, %s172
      %p181 = scmp.eq.s32.totalorder %s30, 0
      %p182 = por %p180, %p181
      %p183 = scmp.ne.s32.totalorder %s171, %s172
      %p184 = scmp.eq.s32.totalorder %s31, 3
      %p185 = por %p183, %p184
      %p187 = scmp.ne.s32.totalorder %s172, %s186
      %p188 = scmp.eq.s32.totalorder %s31, 0
      %p189 = por %p187, %p188
      %s191 = sadd.s32 %s190, 1
      %p194 = scmp.eq.s32.totalorder %s25, 3
      %p195 = scmp.ne.s32.totalorder %s190, %s192
      %p196 = scmp.eq.s32.totalorder %s25, 0
      %p197 = por %p195, %p196
      %p198 = scmp.ne.s32.totalorder %s190, %s192
      %p199 = scmp.eq.s32.totalorder %s30, 3
      %p200 = por %p198, %p199
      %p201 = scmp.ne.s32.totalorder %s192, %s193
      %p202 = scmp.eq.s32.totalorder %s30, 0
      %p203 = por %p201, %p202
      %p204 = scmp.ne.s32.totalorder %s192, %s193
      %p205 = scmp.eq.s32.totalorder %s31, 3
      %p206 = por %p204, %p205
      %p208 = scmp.ne.s32.totalorder %s193, %s207
      %p209 = scmp.eq.s32.totalorder %s31, 0
      %p210 = por %p208, %p209
      %s212 = sadd.s32 %s211, 1
      %p215 = scmp.eq.s32.totalorder %s25, 3
      %p216 = scmp.ne.s32.totalorder %s211, %s213
      %p217 = scmp.eq.s32.totalorder %s25, 0
      %p218 = por %p216, %p217
      %p219 = scmp.ne.s32.totalorder %s211, %s213
      %p220 = scmp.eq.s32.totalorder %s30, 3
      %p221 = por %p219, %p220
      %p222 = scmp.ne.s32.totalorder %s213, %s214
      %p223 = scmp.eq.s32.totalorder %s30, 0
      %p224 = por %p222, %p223
      %p225 = scmp.ne.s32.totalorder %s213, %s214
      %p226 = scmp.eq.s32.totalorder %s31, 3
      %p227 = por %p225, %p226
      %p229 = scmp.ne.s32.totalorder %s214, %s228
      %p230 = scmp.eq.s32.totalorder %s31, 0
      %p231 = por %p229, %p230
      %s233 = sadd.s32 %s232, 1
      %p236 = scmp.eq.s32.totalorder %s25, 3
      %p237 = scmp.ne.s32.totalorder %s232, %s234
      %p238 = scmp.eq.s32.totalorder %s25, 0
      %p239 = por %p237, %p238
      %p240 = scmp.ne.s32.totalorder %s232, %s234
      %p241 = scmp.eq.s32.totalorder %s30, 3
      %p242 = por %p240, %p241
      %p243 = scmp.ne.s32.totalorder %s234, %s235
      %p244 = scmp.eq.s32.totalorder %s30, 0
      %p245 = por %p243, %p244
      %p246 = scmp.ne.s32.totalorder %s234, %s235
      %p247 = scmp.eq.s32.totalorder %s31, 3
      %p248 = por %p246, %p247
      %p250 = scmp.ne.s32.totalorder %s235, %s249
      %p251 = scmp.eq.s32.totalorder %s31, 0
      %p252 = por %p250, %p251
      %s254 = sadd.s32 %s253, 1
      %p257 = scmp.eq.s32.totalorder %s25, 3
      %p258 = scmp.ne.s32.totalorder %s253, %s255
      %p259 = scmp.eq.s32.totalorder %s25, 0
      %p260 = por %p258, %p259
      %p261 = scmp.ne.s32.totalorder %s253, %s255
      %p262 = scmp.eq.s32.totalorder %s30, 3
      %p263 = por %p261, %p262
      %p264 = scmp.ne.s32.totalorder %s255, %s256
      %p265 = scmp.eq.s32.totalorder %s30, 0
      %p266 = por %p264, %p265
      %p267 = scmp.ne.s32.totalorder %s255, %s256
      %p268 = scmp.eq.s32.totalorder %s31, 3
      %p269 = por %p267, %p268
      %p271 = scmp.ne.s32.totalorder %s256, %s270
      %p272 = scmp.eq.s32.totalorder %s31, 0
      %p273 = por %p271, %p272
      %p274 = scmp.le.s32.totalorder 1, %s25
      %p275 = scmp.lt.s32.totalorder %s25, 5
      %p276 = pnand %p274, %p275
      %p277 = pneg %p276
      // Predicated region
      $region9: #{tpu_custom_call.1} parent=5 // pred_check
        _
      $region10: #{tpu_custom_call.1} parent=5 // pred_check_branch
        %279 = sbr.rel (%p276) target = $region12
      $region11: #{tpu_custom_call.1} parent=5 // pred_region
        %s280 = ssub.s32 %s25, 1
        // Predicated region
        $region13: #{tpu_custom_call.1} parent=11 // pred_check
          %p281 = pneg %p98
        $region14: #{tpu_custom_call.1} parent=11 // pred_check_branch
          %283 = sbr.rel (%p281) target = $region16
        $region15: #{tpu_custom_call.1} parent=11 // pred_region
          %s285 = ssub.s32 4096, 4096
          %286 = vsyncadd [#allocation7], %s285
          %s287 = sshll.u32 [#allocation8], 4
          %s288 = int_to_ptr.vmem [resolvable:$true] %s287
          %293 = dma.hbm_to_vmem [thread:$0]  %s2, 4096, %s288, [#allocation7], 64, 64, 4
        $region16: #{tpu_custom_call.1} parent=11 // pred_fallthru
          _
        // Predicated region
        $region17: #{tpu_custom_call.1} parent=11 // pred_check
          %p294 = pneg %p119
        $region18: #{tpu_custom_call.1} parent=11 // pred_check_branch
          %296 = sbr.rel (%p294) target = $region20
        $region19: #{tpu_custom_call.1} parent=11 // pred_region
          %s298 = ssub.s32 32, 32
          %299 = vsyncadd [#allocation10], %s298
          %s301 = sshll.u32 [#allocation9], 4
          %s302 = int_to_ptr.vmem [resolvable:$true] %s301
          %304 = dma.hbm_to_vmem [thread:$0]  %s3, 32, %s302, [#allocation10]
        $region20: #{tpu_custom_call.1} parent=11 // pred_fallthru
          _
        // Predicated region
        $region21: #{tpu_custom_call.1} parent=11 // pred_check
          %p305 = pneg %p140
        $region22: #{tpu_custom_call.1} parent=11 // pred_check_branch
          %307 = sbr.rel (%p305) target = $region24
        $region23: #{tpu_custom_call.1} parent=11 // pred_region
          %s309 = ssub.s32 1024, 1024
          %310 = vsyncadd [#allocation10], %s309
          %s311 = sshll.u32 [#allocation11], 4
          %s312 = int_to_ptr.vmem [resolvable:$true] %s311
          %317 = dma.hbm_to_vmem [thread:$0]  %s4, 1024, %s312, [#allocation10], 64, 64, 4
        $region24: #{tpu_custom_call.1} parent=11 // pred_fallthru
          _
        // Predicated region
        $region25: #{tpu_custom_call.1} parent=11 // pred_check
          %p318 = pneg %p161
        $region26: #{tpu_custom_call.1} parent=11 // pred_check_branch
          %320 = sbr.rel (%p318) target = $region28
        $region27: #{tpu_custom_call.1} parent=11 // pred_region
          %s322 = ssub.s32 128, 128
          %323 = vsyncadd [#allocation13], %s322
          %s325 = sshll.u32 [#allocation12], 4
          %s326 = int_to_ptr.vmem [resolvable:$true] %s325
          %328 = dma.hbm_to_vmem [thread:$0]  %s5, 128, %s326, [#allocation13]
        $region28: #{tpu_custom_call.1} parent=11 // pred_fallthru
          _
        // Predicated region
        $region29: #{tpu_custom_call.1} parent=11 // pred_check
          %p329 = pneg %p182
        $region30: #{tpu_custom_call.1} parent=11 // pred_check_branch
          %331 = sbr.rel (%p329) target = $region32
        $region31: #{tpu_custom_call.1} parent=11 // pred_region
          _
        $region32: #{tpu_custom_call.1} parent=11 // pred_fallthru
          _
        // Predicated region
        $region33: #{tpu_custom_call.1} parent=11 // pred_check
          %p332 = pneg %p203
        $region34: #{tpu_custom_call.1} parent=11 // pred_check_branch
          %334 = sbr.rel (%p332) target = $region36
        $region35: #{tpu_custom_call.1} parent=11 // pred_region
          _
        $region36: #{tpu_custom_call.1} parent=11 // pred_fallthru
          _
        // Predicated region
        $region37: #{tpu_custom_call.1} parent=11 // pred_check
          %p335 = pneg %p224
        $region38: #{tpu_custom_call.1} parent=11 // pred_check_branch
          %337 = sbr.rel (%p335) target = $region40
        $region39: #{tpu_custom_call.1} parent=11 // pred_region
          _
        $region40: #{tpu_custom_call.1} parent=11 // pred_fallthru
          _
        // Predicated region
        $region41: #{tpu_custom_call.1} parent=11 // pred_check
          %p338 = pneg %p245
        $region42: #{tpu_custom_call.1} parent=11 // pred_check_branch
          %340 = sbr.rel (%p338) target = $region44
        $region43: #{tpu_custom_call.1} parent=11 // pred_region
          %s342 = ssub.s32 128, 128
          %343 = vsyncadd [#allocation13], %s342
          %s345 = sshll.u32 [#allocation14], 4
          %s346 = int_to_ptr.vmem [resolvable:$true] %s345
          %348 = dma.hbm_to_vmem [thread:$0]  %s9, 128, %s346, [#allocation13]
        $region44: #{tpu_custom_call.1} parent=11 // pred_fallthru
          _
      $region12: #{tpu_custom_call.1} parent=5 // pred_fallthru
        _
      %p349 = scmp.lt.s32.totalorder %s25, 4
      // Predicated region
      $region45: #{tpu_custom_call.1} parent=5 // pred_check
        %p350 = pneg %p349
      $region46: #{tpu_custom_call.1} parent=5 // pred_check_branch
        %352 = sbr.rel (%p350) target = $region48
      $region47: #{tpu_custom_call.1} parent=5 // pred_region
        // Predicated region
        $region49: #{tpu_custom_call.1} parent=47 // pred_check
          %p353 = pneg %p45
        $region50: #{tpu_custom_call.1} parent=47 // pred_check_branch
          %355 = sbr.rel (%p353) target = $region52
        $region51: #{tpu_custom_call.1} parent=47 // pred_region
          %s356 = sand.u32 %s35, 1
          %s357 = scalar_lea.sflag [#allocation4], %s356
          %s358 = sand.u32 %s35, 1
          %s359 = smul.addr %s358, 36
          %s360 = scalar_lea.vmem [#allocation3], %s359
          %s361 = smul.u32 9, %s25
          %s363 = ssub.s32 576, 576
          %364 = vsyncadd %s357, %s363
          %s365 = smul.addr %s361, 64
          %s366 = scalar_lea.hbm %s0, %s365
          %s368 = sshll.u32 %s360, 4
          %s369 = int_to_ptr.vmem [resolvable:$true] %s368
          %371 = dma.hbm_to_vmem [thread:$0]  %s366, 576, %s369, %s357
        $region52: #{tpu_custom_call.1} parent=47 // pred_fallthru
          _
        // Predicated region
        $region53: #{tpu_custom_call.1} parent=47 // pred_check
          %p372 = pneg %p71
        $region54: #{tpu_custom_call.1} parent=47 // pred_check_branch
          %374 = sbr.rel (%p372) target = $region56
        $region55: #{tpu_custom_call.1} parent=47 // pred_region
          %s375 = sand.u32 %s25, 1
          %s376 = scalar_lea.sflag [#allocation7], %s375
          %s377 = sand.u32 %s61, 1
          %s378 = smul.addr %s377, 576
          %s379 = scalar_lea.vmem [#allocation6], %s378
          %s380 = smul.u32 144, %s25
          %s382 = ssub.s32 9216, 9216
          %383 = vsyncadd %s376, %s382
          %s384 = smul.addr %s380, 64
          %s385 = scalar_lea.hbm %s1, %s384
          %s386 = sshll.u32 %s379, 4
          %s387 = int_to_ptr.vmem [resolvable:$true] %s386
          %392 = dma.hbm_to_vmem [thread:$0]  %s385, 9216, %s387, %s376, 64, 64, 4
        $region56: #{tpu_custom_call.1} parent=47 // pred_fallthru
          _
      $region48: #{tpu_custom_call.1} parent=5 // pred_fallthru
        _
      %p393 = scmp.le.s32.totalorder 1, %s25
      %p394 = scmp.lt.s32.totalorder %s25, 5
      %p395 = pnand %p393, %p394
      %p396 = pneg %p395
      // Predicated region
      $region57: #{tpu_custom_call.1} parent=5 // pred_check
        _
      $region58: #{tpu_custom_call.1} parent=5 // pred_check_branch
        %398 = sbr.rel (%p395) target = $region60
      $region59: #{tpu_custom_call.1} parent=5 // pred_region
        %s399 = ssub.s32 %s25, 1
        %s400 = sand.u32 %s38, 1
        %s401 = scalar_lea.sflag [#allocation4], %s400
        %s402 = sand.u32 %s38, 1
        %s403 = smul.addr %s402, 36
        %s404 = scalar_lea.vmem [#allocation3], %s403
        // Predicated region
        $region61: #{tpu_custom_call.1} parent=59 // pred_check
          %p405 = pneg %p51
        $region62: #{tpu_custom_call.1} parent=59 // pred_check_branch
          %407 = sbr.rel (%p405) target = $region64
        $region63: #{tpu_custom_call.1} parent=59 // pred_region
          %408 = dma.done %s401, 576
        $region64: #{tpu_custom_call.1} parent=59 // pred_fallthru
          _
        %s409 = sand.u32 %s30, 1
        %s410 = scalar_lea.sflag [#allocation7], %s409
        %s411 = sand.u32 %s64, 1
        %s412 = smul.addr %s411, 576
        %s413 = scalar_lea.vmem [#allocation6], %s412
        // Predicated region
        $region65: #{tpu_custom_call.1} parent=59 // pred_check
          %p414 = pneg %p77
        $region66: #{tpu_custom_call.1} parent=59 // pred_check_branch
          %416 = sbr.rel (%p414) target = $region68
        $region67: #{tpu_custom_call.1} parent=59 // pred_region
          %417 = dma.done %s410, 9216
        $region68: #{tpu_custom_call.1} parent=59 // pred_fallthru
          _
        // Predicated region
        $region69: #{tpu_custom_call.1} parent=59 // pred_check
          %p418 = pneg %p98
        $region70: #{tpu_custom_call.1} parent=59 // pred_check_branch
          %420 = sbr.rel (%p418) target = $region72
        $region71: #{tpu_custom_call.1} parent=59 // pred_region
          %421 = dma.done [#allocation7], 4096
        $region72: #{tpu_custom_call.1} parent=59 // pred_fallthru
          _
        // Predicated region
        $region73: #{tpu_custom_call.1} parent=59 // pred_check
          %p422 = pneg %p119
        $region74: #{tpu_custom_call.1} parent=59 // pred_check_branch
          %424 = sbr.rel (%p422) target = $region76
        $region75: #{tpu_custom_call.1} parent=59 // pred_region
          %425 = dma.done [#allocation10], 32
        $region76: #{tpu_custom_call.1} parent=59 // pred_fallthru
          _
        // Predicated region
        $region77: #{tpu_custom_call.1} parent=59 // pred_check
          %p426 = pneg %p140
        $region78: #{tpu_custom_call.1} parent=59 // pred_check_branch
          %428 = sbr.rel (%p426) target = $region80
        $region79: #{tpu_custom_call.1} parent=59 // pred_region
          %429 = dma.done [#allocation10], 1024
        $region80: #{tpu_custom_call.1} parent=59 // pred_fallthru
          _
        // Predicated region
        $region81: #{tpu_custom_call.1} parent=59 // pred_check
          %p430 = pneg %p161
        $region82: #{tpu_custom_call.1} parent=59 // pred_check_branch
          %432 = sbr.rel (%p430) target = $region84
        $region83: #{tpu_custom_call.1} parent=59 // pred_region
          %433 = dma.done [#allocation13], 128
        $region84: #{tpu_custom_call.1} parent=59 // pred_fallthru
          _
        // Predicated region
        $region85: #{tpu_custom_call.1} parent=59 // pred_check
          %p434 = pneg %p245
        $region86: #{tpu_custom_call.1} parent=59 // pred_check_branch
          %436 = sbr.rel (%p434) target = $region88
        $region87: #{tpu_custom_call.1} parent=59 // pred_region
          %437 = dma.done [#allocation13], 128
        $region88: #{tpu_custom_call.1} parent=59 // pred_fallthru
          _
        %s438 = sand.u32 %s38, 1
        %s439 = scalar_lea.sflag [#allocation4], %s438
        %s440 = sand.u32 %s38, 1
        %s441 = smul.addr %s440, 36
        %s442 = scalar_lea.vmem [#allocation3], %s441
        %p443 = pneg %p51
        %p444 = pneg %p48
        %s445 = sand.u32 %s30, 1
        %s446 = scalar_lea.sflag [#allocation7], %s445
        %s447 = sand.u32 %s64, 1
        %s448 = smul.addr %s447, 576
        %s449 = scalar_lea.vmem [#allocation6], %s448
        %p450 = pneg %p77
        %p451 = pneg %p74
        %p452 = pneg %p98
        %p453 = pneg %p95
        %p454 = pneg %p119
        %p455 = pneg %p116
        %p456 = pneg %p140
        %p457 = pneg %p137
        %p458 = pneg %p161
        %p459 = pneg %p158
        %p460 = pneg %p182
        %p461 = pneg %p179
        %p462 = pneg %p203
        %p463 = pneg %p200
        %p464 = pneg %p224
        %p465 = pneg %p221
        %p466 = pneg %p245
        %p467 = pneg %p242
        %p468 = pneg %p266
        %p469 = pneg %p263
        %s470 = smul.u32 9, %s30
        %s471 = smul.u32 144, %s30
        %p473 = scmp.eq.s32.totalorder %s30, 0
        // Predicated region
        $region89: #{tpu_custom_call.1} parent=59 // pred_check
          %p474 = pneg %p473
        $region90: #{tpu_custom_call.1} parent=59 // pred_check_branch
          %476 = sbr.rel (%p474) target = $region92
        $region91: #{tpu_custom_call.1} parent=59 // pred_region
          %477 = vst [vmem:[#allocation2] sm:$0xff] 0.0
        $region92: #{tpu_custom_call.1} parent=59 // pred_fallthru
          _
        %v478 = vld [vmem:[#allocation2] sm:$0xff]
        %v479 = vld [vmem:[%s404] sm:$0xff]
        %v480 = vld [vmem:[%s404 + $0x8] sm:$0xff]
        %v481 = vld [vmem:[%s404 + $0x10] sm:$0xff]
        %v482 = vld [vmem:[%s404 + $0x18] sm:$0xff]
        %v483 = vld [vmem:[%s404 + $0x20] sm:$0xf]
        %v484 = vld [vmem:[%s413] sm:$0xf]
        %v485 = vld [vmem:[%s413 + $0x4] sm:$0xf]
        %v486 = vld [vmem:[%s413 + $0x8] sm:$0xf]
        %v487 = vld [vmem:[%s413 + $0xc] sm:$0xf]
        %v488 = vld [vmem:[%s413 + $0x10] sm:$0xf]
        %v489 = vld [vmem:[%s413 + $0x14] sm:$0xf]
        %v490 = vld [vmem:[%s413 + $0x18] sm:$0xf]
        %v491 = vld [vmem:[%s413 + $0x1c] sm:$0xf]
        %v492 = vld [vmem:[%s413 + $0x20] sm:$0xf]
        %v493 = vld [vmem:[%s413 + $0x24] sm:$0xf]
        %v494 = vld [vmem:[%s413 + $0x28] sm:$0xf]
        %v495 = vld [vmem:[%s413 + $0x2c] sm:$0xf]
        %v496 = vld [vmem:[%s413 + $0x30] sm:$0xf]
        %v497 = vld [vmem:[%s413 + $0x34] sm:$0xf]
        %v498 = vld [vmem:[%s413 + $0x38] sm:$0xf]
        %v499 = vld [vmem:[%s413 + $0x3c] sm:$0xf]
        %v500 = vld [vmem:[%s413 + $0x40] sm:$0xf]
        %v501 = vld [vmem:[%s413 + $0x44] sm:$0xf]
        %v502 = vld [vmem:[%s413 + $0x48] sm:$0xf]
        %v503 = vld [vmem:[%s413 + $0x4c] sm:$0xf]
        %v504 = vld [vmem:[%s413 + $0x50] sm:$0xf]
        %v505 = vld [vmem:[%s413 + $0x54] sm:$0xf]
        %v506 = vld [vmem:[%s413 + $0x58] sm:$0xf]
        %v507 = vld [vmem:[%s413 + $0x5c] sm:$0xf]
        %v508 = vld [vmem:[%s413 + $0x60] sm:$0xf]
        %v509 = vld [vmem:[%s413 + $0x64] sm:$0xf]
        %v510 = vld [vmem:[%s413 + $0x68] sm:$0xf]
        %v511 = vld [vmem:[%s413 + $0x6c] sm:$0xf]
        %v512 = vld [vmem:[%s413 + $0x70] sm:$0xf]
        %v513 = vld [vmem:[%s413 + $0x74] sm:$0xf]
        %v514 = vld [vmem:[%s413 + $0x78] sm:$0xf]
        %v515 = vld [vmem:[%s413 + $0x7c] sm:$0xf]
        %v516 = vld [vmem:[%s413 + $0x80] sm:$0xf]
        %v517 = vld [vmem:[%s413 + $0x84] sm:$0xf]
        %v518 = vld [vmem:[%s413 + $0x88] sm:$0xf]
        %v519 = vld [vmem:[%s413 + $0x8c] sm:$0xf]
        %v520 = vld [vmem:[%s413 + $0x90] sm:$0xf]
        %v521 = vld [vmem:[%s413 + $0x94] sm:$0xf]
        %v522 = vld [vmem:[%s413 + $0x98] sm:$0xf]
        %v523 = vld [vmem:[%s413 + $0x9c] sm:$0xf]
        %v524 = vld [vmem:[%s413 + $0xa0] sm:$0xf]
        %v525 = vld [vmem:[%s413 + $0xa4] sm:$0xf]
        %v526 = vld [vmem:[%s413 + $0xa8] sm:$0xf]
        %v527 = vld [vmem:[%s413 + $0xac] sm:$0xf]
        %v528 = vld [vmem:[%s413 + $0xb0] sm:$0xf]
        %v529 = vld [vmem:[%s413 + $0xb4] sm:$0xf]
        %v530 = vld [vmem:[%s413 + $0xb8] sm:$0xf]
        %v531 = vld [vmem:[%s413 + $0xbc] sm:$0xf]
        %v532 = vld [vmem:[%s413 + $0xc0] sm:$0xf]
        %v533 = vld [vmem:[%s413 + $0xc4] sm:$0xf]
        %v534 = vld [vmem:[%s413 + $0xc8] sm:$0xf]
        %v535 = vld [vmem:[%s413 + $0xcc] sm:$0xf]
        %v536 = vld [vmem:[%s413 + $0xd0] sm:$0xf]
        %v537 = vld [vmem:[%s413 + $0xd4] sm:$0xf]
        %v538 = vld [vmem:[%s413 + $0xd8] sm:$0xf]
        %v539 = vld [vmem:[%s413 + $0xdc] sm:$0xf]
        %v540 = vld [vmem:[%s413 + $0xe0] sm:$0xf]
        %v541 = vld [vmem:[%s413 + $0xe4] sm:$0xf]
        %v542 = vld [vmem:[%s413 + $0xe8] sm:$0xf]
        %v543 = vld [vmem:[%s413 + $0xec] sm:$0xf]
        %v544 = vld [vmem:[%s413 + $0xf0] sm:$0xf]
        %v545 = vld [vmem:[%s413 + $0xf4] sm:$0xf]
        %v546 = vld [vmem:[%s413 + $0xf8] sm:$0xf]
        %v547 = vld [vmem:[%s413 + $0xfc] sm:$0xf]
        %v548 = vld [vmem:[%s413 + $0x100] sm:$0xf]
        %v549 = vld [vmem:[%s413 + $0x104] sm:$0xf]
        %v550 = vld [vmem:[%s413 + $0x108] sm:$0xf]
        %v551 = vld [vmem:[%s413 + $0x10c] sm:$0xf]
        %v552 = vld [vmem:[%s413 + $0x110] sm:$0xf]
        %v553 = vld [vmem:[%s413 + $0x114] sm:$0xf]
        %v554 = vld [vmem:[%s413 + $0x118] sm:$0xf]
        %v555 = vld [vmem:[%s413 + $0x11c] sm:$0xf]
        %v556 = vld [vmem:[%s413 + $0x120] sm:$0xf]
        %v557 = vld [vmem:[%s413 + $0x124] sm:$0xf]
        %v558 = vld [vmem:[%s413 + $0x128] sm:$0xf]
        %v559 = vld [vmem:[%s413 + $0x12c] sm:$0xf]
        %v560 = vld [vmem:[%s413 + $0x130] sm:$0xf]
        %v561 = vld [vmem:[%s413 + $0x134] sm:$0xf]
        %v562 = vld [vmem:[%s413 + $0x138] sm:$0xf]
        %v563 = vld [vmem:[%s413 + $0x13c] sm:$0xf]
        %v564 = vld [vmem:[%s413 + $0x140] sm:$0xf]
        %v565 = vld [vmem:[%s413 + $0x144] sm:$0xf]
        %v566 = vld [vmem:[%s413 + $0x148] sm:$0xf]
        %v567 = vld [vmem:[%s413 + $0x14c] sm:$0xf]
        %v568 = vld [vmem:[%s413 + $0x150] sm:$0xf]
        %v569 = vld [vmem:[%s413 + $0x154] sm:$0xf]
        %v570 = vld [vmem:[%s413 + $0x158] sm:$0xf]
        %v571 = vld [vmem:[%s413 + $0x15c] sm:$0xf]
        %v572 = vld [vmem:[%s413 + $0x160] sm:$0xf]
        %v573 = vld [vmem:[%s413 + $0x164] sm:$0xf]
        %v574 = vld [vmem:[%s413 + $0x168] sm:$0xf]
        %v575 = vld [vmem:[%s413 + $0x16c] sm:$0xf]
        %v576 = vld [vmem:[%s413 + $0x170] sm:$0xf]
        %v577 = vld [vmem:[%s413 + $0x174] sm:$0xf]
        %v578 = vld [vmem:[%s413 + $0x178] sm:$0xf]
        %v579 = vld [vmem:[%s413 + $0x17c] sm:$0xf]
        %v580 = vld [vmem:[%s413 + $0x180] sm:$0xf]
        %v581 = vld [vmem:[%s413 + $0x184] sm:$0xf]
        %v582 = vld [vmem:[%s413 + $0x188] sm:$0xf]
        %v583 = vld [vmem:[%s413 + $0x18c] sm:$0xf]
        %v584 = vld [vmem:[%s413 + $0x190] sm:$0xf]
        %v585 = vld [vmem:[%s413 + $0x194] sm:$0xf]
        %v586 = vld [vmem:[%s413 + $0x198] sm:$0xf]
        %v587 = vld [vmem:[%s413 + $0x19c] sm:$0xf]
        %v588 = vld [vmem:[%s413 + $0x1a0] sm:$0xf]
        %v589 = vld [vmem:[%s413 + $0x1a4] sm:$0xf]
        %v590 = vld [vmem:[%s413 + $0x1a8] sm:$0xf]
        %v591 = vld [vmem:[%s413 + $0x1ac] sm:$0xf]
        %v592 = vld [vmem:[%s413 + $0x1b0] sm:$0xf]
        %v593 = vld [vmem:[%s413 + $0x1b4] sm:$0xf]
        %v594 = vld [vmem:[%s413 + $0x1b8] sm:$0xf]
        %v595 = vld [vmem:[%s413 + $0x1bc] sm:$0xf]
        %v596 = vld [vmem:[%s413 + $0x1c0] sm:$0xf]
        %v597 = vld [vmem:[%s413 + $0x1c4] sm:$0xf]
        %v598 = vld [vmem:[%s413 + $0x1c8] sm:$0xf]
        %v599 = vld [vmem:[%s413 + $0x1cc] sm:$0xf]
        %v600 = vld [vmem:[%s413 + $0x1d0] sm:$0xf]
        %v601 = vld [vmem:[%s413 + $0x1d4] sm:$0xf]
        %v602 = vld [vmem:[%s413 + $0x1d8] sm:$0xf]
        %v603 = vld [vmem:[%s413 + $0x1dc] sm:$0xf]
        %v604 = vld [vmem:[%s413 + $0x1e0] sm:$0xf]
        %v605 = vld [vmem:[%s413 + $0x1e4] sm:$0xf]
        %v606 = vld [vmem:[%s413 + $0x1e8] sm:$0xf]
        %v607 = vld [vmem:[%s413 + $0x1ec] sm:$0xf]
        %v608 = vld [vmem:[%s413 + $0x1f0] sm:$0xf]
        %v609 = vld [vmem:[%s413 + $0x1f4] sm:$0xf]
        %v610 = vld [vmem:[%s413 + $0x1f8] sm:$0xf]
        %v611 = vld [vmem:[%s413 + $0x1fc] sm:$0xf]
        %v612 = vld [vmem:[%s413 + $0x200] sm:$0xf]
        %v613 = vld [vmem:[%s413 + $0x204] sm:$0xf]
        %v614 = vld [vmem:[%s413 + $0x208] sm:$0xf]
        %v615 = vld [vmem:[%s413 + $0x20c] sm:$0xf]
        %v616 = vld [vmem:[%s413 + $0x210] sm:$0xf]
        %v617 = vld [vmem:[%s413 + $0x214] sm:$0xf]
        %v618 = vld [vmem:[%s413 + $0x218] sm:$0xf]
        %v619 = vld [vmem:[%s413 + $0x21c] sm:$0xf]
        %v620 = vld [vmem:[%s413 + $0x220] sm:$0xf]
        %v621 = vld [vmem:[%s413 + $0x224] sm:$0xf]
        %v622 = vld [vmem:[%s413 + $0x228] sm:$0xf]
        %v623 = vld [vmem:[%s413 + $0x22c] sm:$0xf]
        %v624 = vld [vmem:[%s413 + $0x230] sm:$0xf]
        %v625 = vld [vmem:[%s413 + $0x234] sm:$0xf]
        %v626 = vld [vmem:[%s413 + $0x238] sm:$0xf]
        %v627 = vld [vmem:[%s413 + $0x23c] sm:$0xf]
        %v633 = vunpack.c.l.b16 %v479
        %v634 = vunpack.c.h.b16 %v479
        %v635 = vunpack.c.l.b16 %v480
        %v636 = vunpack.c.h.b16 %v480
        %v637 = vunpack.c.l.b16 %v481
        %v638 = vunpack.c.h.b16 %v481
        %v639 = vunpack.c.l.b16 %v482
        %v640 = vunpack.c.h.b16 %v482
        %v641 = vunpack.c.l.b16 %v483
        %v642 = vpack.c.b16 %v633, %v633
        %v643 = vpack.c.b16 %v634, %v634
        %v644 = vpack.c.b16 %v635, %v635
        %v645 = vpack.c.b16 %v636, %v636
        %v646 = vpack.c.b16 %v637, %v637
        %v647 = vpack.c.b16 %v638, %v638
        %v648 = vpack.c.b16 %v639, %v639
        %v649 = vpack.c.b16 %v640, %v640
        %v650 = vpack.c.b16 %v641, %v641
        %v804 = vunpack.c.l.b16 %v484
        %v805 = vunpack.c.l.b16 %v485
        %v806 = vunpack.c.l.b16 %v486
        %v807 = vunpack.c.l.b16 %v487
        %v808 = vunpack.c.l.b16 %v488
        %v809 = vunpack.c.l.b16 %v489
        %v810 = vunpack.c.l.b16 %v490
        %v811 = vunpack.c.l.b16 %v491
        %v812 = vunpack.c.l.b16 %v492
        %v813 = vunpack.c.l.b16 %v493
        %v814 = vunpack.c.l.b16 %v494
        %v815 = vunpack.c.l.b16 %v495
        %v816 = vunpack.c.l.b16 %v496
        %v817 = vunpack.c.l.b16 %v497
        %v818 = vunpack.c.l.b16 %v498
        %v819 = vunpack.c.l.b16 %v499
        %v820 = vunpack.c.l.b16 %v500
        %v821 = vunpack.c.l.b16 %v501
        %v822 = vunpack.c.l.b16 %v502
        %v823 = vunpack.c.l.b16 %v503
        %v824 = vunpack.c.l.b16 %v504
        %v825 = vunpack.c.l.b16 %v505
        %v826 = vunpack.c.l.b16 %v506
        %v827 = vunpack.c.l.b16 %v507
        %v828 = vunpack.c.l.b16 %v508
        %v829 = vunpack.c.l.b16 %v509
        %v830 = vunpack.c.l.b16 %v510
        %v831 = vunpack.c.l.b16 %v511
        %v832 = vunpack.c.l.b16 %v512
        %v833 = vunpack.c.l.b16 %v513
        %v834 = vunpack.c.l.b16 %v514
        %v835 = vunpack.c.l.b16 %v515
        %v836 = vunpack.c.l.b16 %v516
        %v837 = vunpack.c.l.b16 %v517
        %v838 = vunpack.c.l.b16 %v518
        %v839 = vunpack.c.l.b16 %v519
        %v840 = vunpack.c.l.b16 %v520
        %v841 = vunpack.c.l.b16 %v521
        %v842 = vunpack.c.l.b16 %v522
        %v843 = vunpack.c.l.b16 %v523
        %v844 = vunpack.c.l.b16 %v524
        %v845 = vunpack.c.l.b16 %v525
        %v846 = vunpack.c.l.b16 %v526
        %v847 = vunpack.c.l.b16 %v527
        %v848 = vunpack.c.l.b16 %v528
        %v849 = vunpack.c.l.b16 %v529
        %v850 = vunpack.c.l.b16 %v530
        %v851 = vunpack.c.l.b16 %v531
        %v852 = vunpack.c.l.b16 %v532
        %v853 = vunpack.c.l.b16 %v533
        %v854 = vunpack.c.l.b16 %v534
        %v855 = vunpack.c.l.b16 %v535
        %v856 = vunpack.c.l.b16 %v536
        %v857 = vunpack.c.l.b16 %v537
        %v858 = vunpack.c.l.b16 %v538
        %v859 = vunpack.c.l.b16 %v539
        %v860 = vunpack.c.l.b16 %v540
        %v861 = vunpack.c.l.b16 %v541
        %v862 = vunpack.c.l.b16 %v542
        %v863 = vunpack.c.l.b16 %v543
        %v864 = vunpack.c.l.b16 %v544
        %v865 = vunpack.c.l.b16 %v545
        %v866 = vunpack.c.l.b16 %v546
        %v867 = vunpack.c.l.b16 %v547
        %v868 = vunpack.c.l.b16 %v548
        %v869 = vunpack.c.l.b16 %v549
        %v870 = vunpack.c.l.b16 %v550
        %v871 = vunpack.c.l.b16 %v551
        %v872 = vunpack.c.l.b16 %v552
        %v873 = vunpack.c.l.b16 %v553
        %v874 = vunpack.c.l.b16 %v554
        %v875 = vunpack.c.l.b16 %v555
        %v876 = vunpack.c.l.b16 %v556
        %v877 = vunpack.c.l.b16 %v557
        %v878 = vunpack.c.l.b16 %v558
        %v879 = vunpack.c.l.b16 %v559
        %v880 = vunpack.c.l.b16 %v560
        %v881 = vunpack.c.l.b16 %v561
        %v882 = vunpack.c.l.b16 %v562
        %v883 = vunpack.c.l.b16 %v563
        %v884 = vunpack.c.l.b16 %v564
        %v885 = vunpack.c.l.b16 %v565
        %v886 = vunpack.c.l.b16 %v566
        %v887 = vunpack.c.l.b16 %v567
        %v888 = vunpack.c.l.b16 %v568
        %v889 = vunpack.c.l.b16 %v569
        %v890 = vunpack.c.l.b16 %v570
        %v891 = vunpack.c.l.b16 %v571
        %v892 = vunpack.c.l.b16 %v572
        %v893 = vunpack.c.l.b16 %v573
        %v894 = vunpack.c.l.b16 %v574
        %v895 = vunpack.c.l.b16 %v575
        %v896 = vunpack.c.l.b16 %v576
        %v897 = vunpack.c.l.b16 %v577
        %v898 = vunpack.c.l.b16 %v578
        %v899 = vunpack.c.l.b16 %v579
        %v900 = vunpack.c.l.b16 %v580
        %v901 = vunpack.c.l.b16 %v581
        %v902 = vunpack.c.l.b16 %v582
        %v903 = vunpack.c.l.b16 %v583
        %v904 = vunpack.c.l.b16 %v584
        %v905 = vunpack.c.l.b16 %v585
        %v906 = vunpack.c.l.b16 %v586
        %v907 = vunpack.c.l.b16 %v587
        %v908 = vunpack.c.l.b16 %v588
        %v909 = vunpack.c.l.b16 %v589
        %v910 = vunpack.c.l.b16 %v590
        %v911 = vunpack.c.l.b16 %v591
        %v912 = vunpack.c.l.b16 %v592
        %v913 = vunpack.c.l.b16 %v593
        %v914 = vunpack.c.l.b16 %v594
        %v915 = vunpack.c.l.b16 %v595
        %v916 = vunpack.c.l.b16 %v596
        %v917 = vunpack.c.l.b16 %v597
        %v918 = vunpack.c.l.b16 %v598
        %v919 = vunpack.c.l.b16 %v599
        %v920 = vunpack.c.l.b16 %v600
        %v921 = vunpack.c.l.b16 %v601
        %v922 = vunpack.c.l.b16 %v602
        %v923 = vunpack.c.l.b16 %v603
        %v924 = vunpack.c.l.b16 %v604
        %v925 = vunpack.c.l.b16 %v605
        %v926 = vunpack.c.l.b16 %v606
        %v927 = vunpack.c.l.b16 %v607
        %v928 = vunpack.c.l.b16 %v608
        %v929 = vunpack.c.l.b16 %v609
        %v930 = vunpack.c.l.b16 %v610
        %v931 = vunpack.c.l.b16 %v611
        %v932 = vunpack.c.l.b16 %v612
        %v933 = vunpack.c.l.b16 %v613
        %v934 = vunpack.c.l.b16 %v614
        %v935 = vunpack.c.l.b16 %v615
        %v936 = vunpack.c.l.b16 %v616
        %v937 = vunpack.c.l.b16 %v617
        %v938 = vunpack.c.l.b16 %v618
        %v939 = vunpack.c.l.b16 %v619
        %v940 = vunpack.c.l.b16 %v620
        %v941 = vunpack.c.l.b16 %v621
        %v942 = vunpack.c.l.b16 %v622
        %v943 = vunpack.c.l.b16 %v623
        %v944 = vunpack.c.l.b16 %v624
        %v945 = vunpack.c.l.b16 %v625
        %v946 = vunpack.c.l.b16 %v626
        %v947 = vunpack.c.l.b16 %v627
        %v948 = vpack.c.b16 %v805, %v804
        %v949 = vpack.c.b16 %v807, %v806
        %v950 = vpack.c.b16 %v809, %v808
        %v951 = vpack.c.b16 %v811, %v810
        %v952 = vpack.c.b16 %v813, %v812
        %v953 = vpack.c.b16 %v815, %v814
        %v954 = vpack.c.b16 %v817, %v816
        %v955 = vpack.c.b16 %v819, %v818
        %v956 = vpack.c.b16 %v821, %v820
        %v957 = vpack.c.b16 %v823, %v822
        %v958 = vpack.c.b16 %v825, %v824
        %v959 = vpack.c.b16 %v827, %v826
        %v960 = vpack.c.b16 %v829, %v828
        %v961 = vpack.c.b16 %v831, %v830
        %v962 = vpack.c.b16 %v833, %v832
        %v963 = vpack.c.b16 %v835, %v834
        %v964 = vpack.c.b16 %v837, %v836
        %v965 = vpack.c.b16 %v839, %v838
        %v966 = vpack.c.b16 %v841, %v840
        %v967 = vpack.c.b16 %v843, %v842
        %v968 = vpack.c.b16 %v845, %v844
        %v969 = vpack.c.b16 %v847, %v846
        %v970 = vpack.c.b16 %v849, %v848
        %v971 = vpack.c.b16 %v851, %v850
        %v972 = vpack.c.b16 %v853, %v852
        %v973 = vpack.c.b16 %v855, %v854
        %v974 = vpack.c.b16 %v857, %v856
        %v975 = vpack.c.b16 %v859, %v858
        %v976 = vpack.c.b16 %v861, %v860
        %v977 = vpack.c.b16 %v863, %v862
        %v978 = vpack.c.b16 %v865, %v864
        %v979 = vpack.c.b16 %v867, %v866
        %v980 = vpack.c.b16 %v869, %v868
        %v981 = vpack.c.b16 %v871, %v870
        %v982 = vpack.c.b16 %v873, %v872
        %v983 = vpack.c.b16 %v875, %v874
        %v984 = vpack.c.b16 %v877, %v876
        %v985 = vpack.c.b16 %v879, %v878
        %v986 = vpack.c.b16 %v881, %v880
        %v987 = vpack.c.b16 %v883, %v882
        %v988 = vpack.c.b16 %v885, %v884
        %v989 = vpack.c.b16 %v887, %v886
        %v990 = vpack.c.b16 %v889, %v888
        %v991 = vpack.c.b16 %v891, %v890
        %v992 = vpack.c.b16 %v893, %v892
        %v993 = vpack.c.b16 %v895, %v894
        %v994 = vpack.c.b16 %v897, %v896
        %v995 = vpack.c.b16 %v899, %v898
        %v996 = vpack.c.b16 %v901, %v900
        %v997 = vpack.c.b16 %v903, %v902
        %v998 = vpack.c.b16 %v905, %v904
        %v999 = vpack.c.b16 %v907, %v906
        %v1000 = vpack.c.b16 %v909, %v908
        %v1001 = vpack.c.b16 %v911, %v910
        %v1002 = vpack.c.b16 %v913, %v912
        %v1003 = vpack.c.b16 %v915, %v914
        %v1004 = vpack.c.b16 %v917, %v916
        %v1005 = vpack.c.b16 %v919, %v918
        %v1006 = vpack.c.b16 %v921, %v920
        %v1007 = vpack.c.b16 %v923, %v922
        %v1008 = vpack.c.b16 %v925, %v924
        %v1009 = vpack.c.b16 %v927, %v926
        %v1010 = vpack.c.b16 %v929, %v928
        %v1011 = vpack.c.b16 %v931, %v930
        %v1012 = vpack.c.b16 %v933, %v932
        %v1013 = vpack.c.b16 %v935, %v934
        %v1014 = vpack.c.b16 %v937, %v936
        %v1015 = vpack.c.b16 %v939, %v938
        %v1016 = vpack.c.b16 %v941, %v940
        %v1017 = vpack.c.b16 %v943, %v942
        %v1018 = vpack.c.b16 %v945, %v944
        %v1019 = vpack.c.b16 %v947, %v946
        %1092 = vmatprep.subr.bf16.mxu0 0
        %1093 = vmatpush1.bf16.msra.mxu0 %v955
        %1094 = vmatprep.subr.bf16.mxu0 0
        %1095 = vmatpush1.bf16.msra.mxu0 %v954
        %1096 = vmatprep.subr.bf16.mxu0 0
        %1097 = vmatpush1.bf16.msra.mxu0 %v953
        %1098 = vmatprep.subr.bf16.mxu0 0
        %1099 = vmatpush1.bf16.msra.mxu0 %v952
        %1100 = vmatprep.subr.bf16.mxu0 0
        %1101 = vmatpush1.bf16.msra.mxu0 %v951
        %1102 = vmatprep.subr.bf16.mxu0 0
        %1103 = vmatpush1.bf16.msra.mxu0 %v950
        %1104 = vmatprep.subr.bf16.mxu0 0
        %1105 = vmatpush1.bf16.msra.mxu0 %v949
        %1106 = vmatprep.subr.bf16.mxu0 0
        %1107 = vmatpush1.bf16.msra.mxu0 %v948
        %1108 = vmatprep.subr.bf16.mxu0 0
        %1109 = vmatpush2.bf16.msra.mxu0 %v963
        %1110 = vmatprep.subr.bf16.mxu0 0
        %1111 = vmatpush2.bf16.msra.mxu0 %v962
        %1112 = vmatprep.subr.bf16.mxu0 0
        %1113 = vmatpush2.bf16.msra.mxu0 %v961
        %1114 = vmatprep.subr.bf16.mxu0 0
        %1115 = vmatpush2.bf16.msra.mxu0 %v960
        %1116 = vmatprep.subr.bf16.mxu0 0
        %1117 = vmatpush2.bf16.msra.mxu0 %v959
        %1118 = vmatprep.subr.bf16.mxu0 0
        %1119 = vmatpush2.bf16.msra.mxu0 %v958
        %1120 = vmatprep.subr.bf16.mxu0 0
        %1121 = vmatpush2.bf16.msra.mxu0 %v957
        %1122 = vmatprep.subr.bf16.mxu0 0
        %1123 = vmatpush2.bf16.msra.mxu0 %v956
        %1124 = vmatprep.mubr.bf16.mxu0 %v643
        %1125 = vmatmul.mubr.bf16.gmra.mxu0 %v642
        %v1126 = vpop.f32.mrf.mxu0
        %v1127 = vadd.f32 0.0, %v1126
        %v1128 = vpop.f32.mrf.mxu0
        %v1129 = vpop.f32.mrf.mxu0
        %v1130 = vpop.f32.mrf.mxu0
        %1131 = vdwg.mxu0
        %1132 = vmatprep.subr.bf16.mxu0 0
        %1133 = vmatpush1.bf16.msra.mxu0 %v971
        %1134 = vmatprep.subr.bf16.mxu0 0
        %1135 = vmatpush1.bf16.msra.mxu0 %v970
        %1136 = vmatprep.subr.bf16.mxu0 0
        %1137 = vmatpush1.bf16.msra.mxu0 %v969
        %1138 = vmatprep.subr.bf16.mxu0 0
        %1139 = vmatpush1.bf16.msra.mxu0 %v968
        %1140 = vmatprep.subr.bf16.mxu0 0
        %1141 = vmatpush1.bf16.msra.mxu0 %v967
        %1142 = vmatprep.subr.bf16.mxu0 0
        %1143 = vmatpush1.bf16.msra.mxu0 %v966
        %1144 = vmatprep.subr.bf16.mxu0 0
        %1145 = vmatpush1.bf16.msra.mxu0 %v965
        %1146 = vmatprep.subr.bf16.mxu0 0
        %1147 = vmatpush1.bf16.msra.mxu0 %v964
        %1148 = vmatprep.subr.bf16.mxu0 0
        %1149 = vmatpush2.bf16.msra.mxu0 %v979
        %1150 = vmatprep.subr.bf16.mxu0 0
        %1151 = vmatpush2.bf16.msra.mxu0 %v978
        %1152 = vmatprep.subr.bf16.mxu0 0
        %1153 = vmatpush2.bf16.msra.mxu0 %v977
        %1154 = vmatprep.subr.bf16.mxu0 0
        %1155 = vmatpush2.bf16.msra.mxu0 %v976
        %1156 = vmatprep.subr.bf16.mxu0 0
        %1157 = vmatpush2.bf16.msra.mxu0 %v975
        %1158 = vmatprep.subr.bf16.mxu0 0
        %1159 = vmatpush2.bf16.msra.mxu0 %v974
        %1160 = vmatprep.subr.bf16.mxu0 0
        %1161 = vmatpush2.bf16.msra.mxu0 %v973
        %1162 = vmatprep.subr.bf16.mxu0 0
        %1163 = vmatpush2.bf16.msra.mxu0 %v972
        %1164 = vmatprep.mubr.bf16.mxu0 %v645
        %1165 = vmatmul.mubr.bf16.gmra.mxu0 %v644
        %v1166 = vpop.f32.mrf.mxu0
        %v1167 = vadd.f32 %v1127, %v1166
        %v1168 = vpop.f32.mrf.mxu0
        %v1169 = vpop.f32.mrf.mxu0
        %v1170 = vpop.f32.mrf.mxu0
        %1171 = vdwg.mxu0
        %1172 = vmatprep.subr.bf16.mxu0 0
        %1173 = vmatpush1.bf16.msra.mxu0 %v987
        %1174 = vmatprep.subr.bf16.mxu0 0
        %1175 = vmatpush1.bf16.msra.mxu0 %v986
        %1176 = vmatprep.subr.bf16.mxu0 0
        %1177 = vmatpush1.bf16.msra.mxu0 %v985
        %1178 = vmatprep.subr.bf16.mxu0 0
        %1179 = vmatpush1.bf16.msra.mxu0 %v984
        %1180 = vmatprep.subr.bf16.mxu0 0
        %1181 = vmatpush1.bf16.msra.mxu0 %v983
        %1182 = vmatprep.subr.bf16.mxu0 0
        %1183 = vmatpush1.bf16.msra.mxu0 %v982
        %1184 = vmatprep.subr.bf16.mxu0 0
        %1185 = vmatpush1.bf16.msra.mxu0 %v981
        %1186 = vmatprep.subr.bf16.mxu0 0
        %1187 = vmatpush1.bf16.msra.mxu0 %v980
        %1188 = vmatprep.subr.bf16.mxu0 0
        %1189 = vmatpush2.bf16.msra.mxu0 %v995
        %1190 = vmatprep.subr.bf16.mxu0 0
        %1191 = vmatpush2.bf16.msra.mxu0 %v994
        %1192 = vmatprep.subr.bf16.mxu0 0
        %1193 = vmatpush2.bf16.msra.mxu0 %v993
        %1194 = vmatprep.subr.bf16.mxu0 0
        %1195 = vmatpush2.bf16.msra.mxu0 %v992
        %1196 = vmatprep.subr.bf16.mxu0 0
        %1197 = vmatpush2.bf16.msra.mxu0 %v991
        %1198 = vmatprep.subr.bf16.mxu0 0
        %1199 = vmatpush2.bf16.msra.mxu0 %v990
        %1200 = vmatprep.subr.bf16.mxu0 0
        %1201 = vmatpush2.bf16.msra.mxu0 %v989
        %1202 = vmatprep.subr.bf16.mxu0 0
        %1203 = vmatpush2.bf16.msra.mxu0 %v988
        %1204 = vmatprep.mubr.bf16.mxu0 %v647
        %1205 = vmatmul.mubr.bf16.gmra.mxu0 %v646
        %v1206 = vpop.f32.mrf.mxu0
        %v1207 = vadd.f32 %v1167, %v1206
        %v1208 = vpop.f32.mrf.mxu0
        %v1209 = vpop.f32.mrf.mxu0
        %v1210 = vpop.f32.mrf.mxu0
        %1211 = vdwg.mxu0
        %1212 = vmatprep.subr.bf16.mxu0 0
        %1213 = vmatpush1.bf16.msra.mxu0 %v1003
        %1214 = vmatprep.subr.bf16.mxu0 0
        %1215 = vmatpush1.bf16.msra.mxu0 %v1002
        %1216 = vmatprep.subr.bf16.mxu0 0
        %1217 = vmatpush1.bf16.msra.mxu0 %v1001
        %1218 = vmatprep.subr.bf16.mxu0 0
        %1219 = vmatpush1.bf16.msra.mxu0 %v1000
        %1220 = vmatprep.subr.bf16.mxu0 0
        %1221 = vmatpush1.bf16.msra.mxu0 %v999
        %1222 = vmatprep.subr.bf16.mxu0 0
        %1223 = vmatpush1.bf16.msra.mxu0 %v998
        %1224 = vmatprep.subr.bf16.mxu0 0
        %1225 = vmatpush1.bf16.msra.mxu0 %v997
        %1226 = vmatprep.subr.bf16.mxu0 0
        %1227 = vmatpush1.bf16.msra.mxu0 %v996
        %1228 = vmatprep.subr.bf16.mxu0 0
        %1229 = vmatpush2.bf16.msra.mxu0 %v1011
        %1230 = vmatprep.subr.bf16.mxu0 0
        %1231 = vmatpush2.bf16.msra.mxu0 %v1010
        %1232 = vmatprep.subr.bf16.mxu0 0
        %1233 = vmatpush2.bf16.msra.mxu0 %v1009
        %1234 = vmatprep.subr.bf16.mxu0 0
        %1235 = vmatpush2.bf16.msra.mxu0 %v1008
        %1236 = vmatprep.subr.bf16.mxu0 0
        %1237 = vmatpush2.bf16.msra.mxu0 %v1007
        %1238 = vmatprep.subr.bf16.mxu0 0
        %1239 = vmatpush2.bf16.msra.mxu0 %v1006
        %1240 = vmatprep.subr.bf16.mxu0 0
        %1241 = vmatpush2.bf16.msra.mxu0 %v1005
        %1242 = vmatprep.subr.bf16.mxu0 0
        %1243 = vmatpush2.bf16.msra.mxu0 %v1004
        %1244 = vmatprep.mubr.bf16.mxu0 %v649
        %1245 = vmatmul.mubr.bf16.gmra.mxu0 %v648
        %v1246 = vpop.f32.mrf.mxu0
        %v1247 = vadd.f32 %v1207, %v1246
        %v1248 = vpop.f32.mrf.mxu0
        %v1249 = vpop.f32.mrf.mxu0
        %v1250 = vpop.f32.mrf.mxu0
        %1251 = vdwg.mxu0
        %1252 = vmatprep.subr.bf16.mxu0 0
        %1253 = vmatpush1.bf16.msra.mxu0 %v1019
        %1254 = vmatprep.subr.bf16.mxu0 0
        %1255 = vmatpush1.bf16.msra.mxu0 %v1018
        %1256 = vmatprep.subr.bf16.mxu0 0
        %1257 = vmatpush1.bf16.msra.mxu0 %v1017
        %1258 = vmatprep.subr.bf16.mxu0 0
        %1259 = vmatpush1.bf16.msra.mxu0 %v1016
        %1260 = vmatprep.subr.bf16.mxu0 0
        %1261 = vmatpush1.bf16.msra.mxu0 %v1015
        %1262 = vmatprep.subr.bf16.mxu0 0
        %1263 = vmatpush1.bf16.msra.mxu0 %v1014
        %1264 = vmatprep.subr.bf16.mxu0 0
        %1265 = vmatpush1.bf16.msra.mxu0 %v1013
        %1266 = vmatprep.subr.bf16.mxu0 0
        %1267 = vmatpush1.bf16.msra.mxu0 %v1012
        %1268 = vmatprep.subr.bf16.mxu0 0
        %1269 = vmatpush2.bf16.msra.mxu0 0
        %1270 = vmatprep.subr.bf16.mxu0 0
        %1271 = vmatpush2.bf16.msra.mxu0 0
        %1272 = vmatprep.subr.bf16.mxu0 0
        %1273 = vmatpush2.bf16.msra.mxu0 0
        %1274 = vmatprep.subr.bf16.mxu0 0
        %1275 = vmatpush2.bf16.msra.mxu0 0
        %1276 = vmatprep.subr.bf16.mxu0 0
        %1277 = vmatpush2.bf16.msra.mxu0 0
        %1278 = vmatprep.subr.bf16.mxu0 0
        %1279 = vmatpush2.bf16.msra.mxu0 0
        %1280 = vmatprep.subr.bf16.mxu0 0
        %1281 = vmatpush2.bf16.msra.mxu0 0
        %1282 = vmatprep.subr.bf16.mxu0 0
        %1283 = vmatpush2.bf16.msra.mxu0 0
        %1284 = vmatprep.mubr.bf16.mxu0 0
        %1285 = vmatmul.mubr.bf16.gmra.mxu0 %v650
        %v1286 = vpop.f32.mrf.mxu0
        %v1287 = vadd.f32 %v1247, %v1286
        %v1288 = vpop.f32.mrf.mxu0
        %v1289 = vpop.f32.mrf.mxu0
        %v1290 = vpop.f32.mrf.mxu0
        %1291 = vdwg.mxu0
        %v1292 = vadd.f32 %v478, %v1287
        %1293 = vst [vmem:[#allocation2] sm:$0xff] %v1292
        %p1294 = scmp.eq.s32.totalorder %s30, 3
        // Predicated region
        $region93: #{tpu_custom_call.1} parent=59 // pred_check
          %p1295 = pneg %p1294
        $region94: #{tpu_custom_call.1} parent=59 // pred_check_branch
          %1297 = sbr.rel (%p1295) target = $region96
        $region95: #{tpu_custom_call.1} parent=59 // pred_region
          %v1298 = vld [vmem:[#allocation14] sm:$0x1]
          %v1299 = vld [vmem:[#allocation14 + $0x1] sm:$0x1]
          %v1300 = vld [vmem:[#allocation14 + $0x2] sm:$0x1]
          %v1301 = vld [vmem:[#allocation14 + $0x3] sm:$0x1]
          %v1302 = vld [vmem:[#allocation14 + $0x4] sm:$0x1]
          %v1303 = vld [vmem:[#allocation14 + $0x5] sm:$0x1]
          %v1304 = vld [vmem:[#allocation2] sm:$0xff]
          %v1305 = vlaneseq
          %v1306 = vshrl.u32 %v1305, 7
          %v1307 = vsub.s32 0, %v1306
          %v1308 = vrot.slane %v1298, %v1307
          %v1309 = vadd.f32 %v1304, %v1308
          %v1310 = vmax.f32 %v1309, 0.0
          %v1311 = vpack.c.bf16 %v1310, %v1310
          %v1312 = vld [vmem:[#allocation8] sm:$0xf]
          %v1313 = vld [vmem:[#allocation8 + $0x4] sm:$0xf]
          %v1314 = vld [vmem:[#allocation8 + $0x8] sm:$0xf]
          %v1315 = vld [vmem:[#allocation8 + $0xc] sm:$0xf]
          %v1316 = vld [vmem:[#allocation8 + $0x10] sm:$0xf]
          %v1317 = vld [vmem:[#allocation8 + $0x14] sm:$0xf]
          %v1318 = vld [vmem:[#allocation8 + $0x18] sm:$0xf]
          %v1319 = vld [vmem:[#allocation8 + $0x1c] sm:$0xf]
          %v1320 = vld [vmem:[#allocation8 + $0x20] sm:$0xf]
          %v1321 = vld [vmem:[#allocation8 + $0x24] sm:$0xf]
          %v1322 = vld [vmem:[#allocation8 + $0x28] sm:$0xf]
          %v1323 = vld [vmem:[#allocation8 + $0x2c] sm:$0xf]
          %v1324 = vld [vmem:[#allocation8 + $0x30] sm:$0xf]
          %v1325 = vld [vmem:[#allocation8 + $0x34] sm:$0xf]
          %v1326 = vld [vmem:[#allocation8 + $0x38] sm:$0xf]
          %v1327 = vld [vmem:[#allocation8 + $0x3c] sm:$0xf]
          %v1328 = vld [vmem:[#allocation8 + $0x40] sm:$0xf]
          %v1329 = vld [vmem:[#allocation8 + $0x44] sm:$0xf]
          %v1330 = vld [vmem:[#allocation8 + $0x48] sm:$0xf]
          %v1331 = vld [vmem:[#allocation8 + $0x4c] sm:$0xf]
          %v1332 = vld [vmem:[#allocation8 + $0x50] sm:$0xf]
          %v1333 = vld [vmem:[#allocation8 + $0x54] sm:$0xf]
          %v1334 = vld [vmem:[#allocation8 + $0x58] sm:$0xf]
          %v1335 = vld [vmem:[#allocation8 + $0x5c] sm:$0xf]
          %v1336 = vld [vmem:[#allocation8 + $0x60] sm:$0xf]
          %v1337 = vld [vmem:[#allocation8 + $0x64] sm:$0xf]
          %v1338 = vld [vmem:[#allocation8 + $0x68] sm:$0xf]
          %v1339 = vld [vmem:[#allocation8 + $0x6c] sm:$0xf]
          %v1340 = vld [vmem:[#allocation8 + $0x70] sm:$0xf]
          %v1341 = vld [vmem:[#allocation8 + $0x74] sm:$0xf]
          %v1342 = vld [vmem:[#allocation8 + $0x78] sm:$0xf]
          %v1343 = vld [vmem:[#allocation8 + $0x7c] sm:$0xf]
          %v1345 = vrot.slane %v1311, 1
          %v1363 = vunpack.c.l.b16 %v1328
          %v1364 = vunpack.c.l.b16 %v1329
          %v1365 = vunpack.c.l.b16 %v1330
          %v1366 = vunpack.c.l.b16 %v1331
          %v1367 = vunpack.c.l.b16 %v1332
          %v1368 = vunpack.c.l.b16 %v1333
          %v1369 = vunpack.c.l.b16 %v1334
          %v1370 = vunpack.c.l.b16 %v1335
          %v1371 = vunpack.c.l.b16 %v1336
          %v1372 = vunpack.c.l.b16 %v1337
          %v1373 = vunpack.c.l.b16 %v1338
          %v1374 = vunpack.c.l.b16 %v1339
          %v1375 = vunpack.c.l.b16 %v1340
          %v1376 = vunpack.c.l.b16 %v1341
          %v1377 = vunpack.c.l.b16 %v1342
          %v1378 = vunpack.c.l.b16 %v1343
          %v1379 = vpack.c.b16 %v1364, %v1363
          %v1380 = vpack.c.b16 %v1366, %v1365
          %v1381 = vpack.c.b16 %v1368, %v1367
          %v1382 = vpack.c.b16 %v1370, %v1369
          %v1383 = vpack.c.b16 %v1372, %v1371
          %v1384 = vpack.c.b16 %v1374, %v1373
          %v1385 = vpack.c.b16 %v1376, %v1375
          %v1386 = vpack.c.b16 %v1378, %v1377
          %1395 = vmatprep.subr.bf16.mxu0 0
          %1396 = vmatpush1.bf16.msra.mxu0 %v1386
          %1397 = vmatprep.subr.bf16.mxu0 0
          %1398 = vmatpush1.bf16.msra.mxu0 %v1385
          %1399 = vmatprep.subr.bf16.mxu0 0
          %1400 = vmatpush1.bf16.msra.mxu0 %v1384
          %1401 = vmatprep.subr.bf16.mxu0 0
          %1402 = vmatpush1.bf16.msra.mxu0 %v1383
          %1403 = vmatprep.subr.bf16.mxu0 0
          %1404 = vmatpush1.bf16.msra.mxu0 %v1382
          %1405 = vmatprep.subr.bf16.mxu0 0
          %1406 = vmatpush1.bf16.msra.mxu0 %v1381
          %1407 = vmatprep.subr.bf16.mxu0 0
          %1408 = vmatpush1.bf16.msra.mxu0 %v1380
          %1409 = vmatprep.subr.bf16.mxu0 0
          %1410 = vmatpush1.bf16.msra.mxu0 %v1379
          %1411 = vmatprep.subr.bf16.mxu0 0
          %1412 = vmatpush2.bf16.msra.mxu0 0
          %1413 = vmatprep.subr.bf16.mxu0 0
          %1414 = vmatpush2.bf16.msra.mxu0 0
          %1415 = vmatprep.subr.bf16.mxu0 0
          %1416 = vmatpush2.bf16.msra.mxu0 0
          %1417 = vmatprep.subr.bf16.mxu0 0
          %1418 = vmatpush2.bf16.msra.mxu0 0
          %1419 = vmatprep.subr.bf16.mxu0 0
          %1420 = vmatpush2.bf16.msra.mxu0 0
          %1421 = vmatprep.subr.bf16.mxu0 0
          %1422 = vmatpush2.bf16.msra.mxu0 0
          %1423 = vmatprep.subr.bf16.mxu0 0
          %1424 = vmatpush2.bf16.msra.mxu0 0
          %1425 = vmatprep.subr.bf16.mxu0 0
          %1426 = vmatpush2.bf16.msra.mxu0 0
          %1427 = vmatprep.mubr.bf16.mxu0 0
          %1428 = vmatmul.mubr.bf16.gmra.mxu0 %v1345
          %v1429 = vpop.f32.mrf.mxu0
          %v1430 = vadd.f32 0.0, %v1429
          %v1431 = vpop.f32.mrf.mxu0
          %v1432 = vpop.f32.mrf.mxu0
          %v1433 = vpop.f32.mrf.mxu0
          %1434 = vdwg.mxu0
          %v1451 = vunpack.c.l.b16 %v1312
          %v1452 = vunpack.c.l.b16 %v1313
          %v1453 = vunpack.c.l.b16 %v1314
          %v1454 = vunpack.c.l.b16 %v1315
          %v1455 = vunpack.c.l.b16 %v1316
          %v1456 = vunpack.c.l.b16 %v1317
          %v1457 = vunpack.c.l.b16 %v1318
          %v1458 = vunpack.c.l.b16 %v1319
          %v1459 = vunpack.c.l.b16 %v1320
          %v1460 = vunpack.c.l.b16 %v1321
          %v1461 = vunpack.c.l.b16 %v1322
          %v1462 = vunpack.c.l.b16 %v1323
          %v1463 = vunpack.c.l.b16 %v1324
          %v1464 = vunpack.c.l.b16 %v1325
          %v1465 = vunpack.c.l.b16 %v1326
          %v1466 = vunpack.c.l.b16 %v1327
          %v1467 = vpack.c.b16 %v1452, %v1451
          %v1468 = vpack.c.b16 %v1454, %v1453
          %v1469 = vpack.c.b16 %v1456, %v1455
          %v1470 = vpack.c.b16 %v1458, %v1457
          %v1471 = vpack.c.b16 %v1460, %v1459
          %v1472 = vpack.c.b16 %v1462, %v1461
          %v1473 = vpack.c.b16 %v1464, %v1463
          %v1474 = vpack.c.b16 %v1466, %v1465
          %1483 = vmatprep.subr.bf16.mxu0 0
          %1484 = vmatpush1.bf16.msra.mxu0 %v1474
          %1485 = vmatprep.subr.bf16.mxu0 0
          %1486 = vmatpush1.bf16.msra.mxu0 %v1473
          %1487 = vmatprep.subr.bf16.mxu0 0
          %1488 = vmatpush1.bf16.msra.mxu0 %v1472
          %1489 = vmatprep.subr.bf16.mxu0 0
          %1490 = vmatpush1.bf16.msra.mxu0 %v1471
          %1491 = vmatprep.subr.bf16.mxu0 0
          %1492 = vmatpush1.bf16.msra.mxu0 %v1470
          %1493 = vmatprep.subr.bf16.mxu0 0
          %1494 = vmatpush1.bf16.msra.mxu0 %v1469
          %1495 = vmatprep.subr.bf16.mxu0 0
          %1496 = vmatpush1.bf16.msra.mxu0 %v1468
          %1497 = vmatprep.subr.bf16.mxu0 0
          %1498 = vmatpush1.bf16.msra.mxu0 %v1467
          %1499 = vmatprep.subr.bf16.mxu0 0
          %1500 = vmatpush2.bf16.msra.mxu0 0
          %1501 = vmatprep.subr.bf16.mxu0 0
          %1502 = vmatpush2.bf16.msra.mxu0 0
          %1503 = vmatprep.subr.bf16.mxu0 0
          %1504 = vmatpush2.bf16.msra.mxu0 0
          %1505 = vmatprep.subr.bf16.mxu0 0
          %1506 = vmatpush2.bf16.msra.mxu0 0
          %1507 = vmatprep.subr.bf16.mxu0 0
          %1508 = vmatpush2.bf16.msra.mxu0 0
          %1509 = vmatprep.subr.bf16.mxu0 0
          %1510 = vmatpush2.bf16.msra.mxu0 0
          %1511 = vmatprep.subr.bf16.mxu0 0
          %1512 = vmatpush2.bf16.msra.mxu0 0
          %1513 = vmatprep.subr.bf16.mxu0 0
          %1514 = vmatpush2.bf16.msra.mxu0 0
          %1515 = vmatprep.mubr.bf16.mxu0 0
          %1516 = vmatmul.mubr.bf16.gmra.mxu0 %v1311
          %v1517 = vpop.f32.mrf.mxu0
          %v1518 = vadd.f32 %v1430, %v1517
          %v1519 = vpop.f32.mrf.mxu0
          %v1520 = vpop.f32.mrf.mxu0
          %v1521 = vpop.f32.mrf.mxu0
          %1522 = vdwg.mxu0
          %v1523 = vld [vmem:[#allocation8 + $0x80] sm:$0xf]
          %v1524 = vld [vmem:[#allocation8 + $0x84] sm:$0xf]
          %v1525 = vld [vmem:[#allocation8 + $0x88] sm:$0xf]
          %v1526 = vld [vmem:[#allocation8 + $0x8c] sm:$0xf]
          %v1527 = vld [vmem:[#allocation8 + $0x90] sm:$0xf]
          %v1528 = vld [vmem:[#allocation8 + $0x94] sm:$0xf]
          %v1529 = vld [vmem:[#allocation8 + $0x98] sm:$0xf]
          %v1530 = vld [vmem:[#allocation8 + $0x9c] sm:$0xf]
          %v1531 = vld [vmem:[#allocation8 + $0xa0] sm:$0xf]
          %v1532 = vld [vmem:[#allocation8 + $0xa4] sm:$0xf]
          %v1533 = vld [vmem:[#allocation8 + $0xa8] sm:$0xf]
          %v1534 = vld [vmem:[#allocation8 + $0xac] sm:$0xf]
          %v1535 = vld [vmem:[#allocation8 + $0xb0] sm:$0xf]
          %v1536 = vld [vmem:[#allocation8 + $0xb4] sm:$0xf]
          %v1537 = vld [vmem:[#allocation8 + $0xb8] sm:$0xf]
          %v1538 = vld [vmem:[#allocation8 + $0xbc] sm:$0xf]
          %v1539 = vrot.slane %v1311, 2
          %v1557 = vunpack.c.l.b16 %v1523
          %v1558 = vunpack.c.l.b16 %v1524
          %v1559 = vunpack.c.l.b16 %v1525
          %v1560 = vunpack.c.l.b16 %v1526
          %v1561 = vunpack.c.l.b16 %v1527
          %v1562 = vunpack.c.l.b16 %v1528
          %v1563 = vunpack.c.l.b16 %v1529
          %v1564 = vunpack.c.l.b16 %v1530
          %v1565 = vunpack.c.l.b16 %v1531
          %v1566 = vunpack.c.l.b16 %v1532
          %v1567 = vunpack.c.l.b16 %v1533
          %v1568 = vunpack.c.l.b16 %v1534
          %v1569 = vunpack.c.l.b16 %v1535
          %v1570 = vunpack.c.l.b16 %v1536
          %v1571 = vunpack.c.l.b16 %v1537
          %v1572 = vunpack.c.l.b16 %v1538
          %v1573 = vpack.c.b16 %v1558, %v1557
          %v1574 = vpack.c.b16 %v1560, %v1559
          %v1575 = vpack.c.b16 %v1562, %v1561
          %v1576 = vpack.c.b16 %v1564, %v1563
          %v1577 = vpack.c.b16 %v1566, %v1565
          %v1578 = vpack.c.b16 %v1568, %v1567
          %v1579 = vpack.c.b16 %v1570, %v1569
          %v1580 = vpack.c.b16 %v1572, %v1571
          %1589 = vmatprep.subr.bf16.mxu0 0
          %1590 = vmatpush1.bf16.msra.mxu0 %v1580
          %1591 = vmatprep.subr.bf16.mxu0 0
          %1592 = vmatpush1.bf16.msra.mxu0 %v1579
          %1593 = vmatprep.subr.bf16.mxu0 0
          %1594 = vmatpush1.bf16.msra.mxu0 %v1578
          %1595 = vmatprep.subr.bf16.mxu0 0
          %1596 = vmatpush1.bf16.msra.mxu0 %v1577
          %1597 = vmatprep.subr.bf16.mxu0 0
          %1598 = vmatpush1.bf16.msra.mxu0 %v1576
          %1599 = vmatprep.subr.bf16.mxu0 0
          %1600 = vmatpush1.bf16.msra.mxu0 %v1575
          %1601 = vmatprep.subr.bf16.mxu0 0
          %1602 = vmatpush1.bf16.msra.mxu0 %v1574
          %1603 = vmatprep.subr.bf16.mxu0 0
          %1604 = vmatpush1.bf16.msra.mxu0 %v1573
          %1605 = vmatprep.subr.bf16.mxu0 0
          %1606 = vmatpush2.bf16.msra.mxu0 0
          %1607 = vmatprep.subr.bf16.mxu0 0
          %1608 = vmatpush2.bf16.msra.mxu0 0
          %1609 = vmatprep.subr.bf16.mxu0 0
          %1610 = vmatpush2.bf16.msra.mxu0 0
          %1611 = vmatprep.subr.bf16.mxu0 0
          %1612 = vmatpush2.bf16.msra.mxu0 0
          %1613 = vmatprep.subr.bf16.mxu0 0
          %1614 = vmatpush2.bf16.msra.mxu0 0
          %1615 = vmatprep.subr.bf16.mxu0 0
          %1616 = vmatpush2.bf16.msra.mxu0 0
          %1617 = vmatprep.subr.bf16.mxu0 0
          %1618 = vmatpush2.bf16.msra.mxu0 0
          %1619 = vmatprep.subr.bf16.mxu0 0
          %1620 = vmatpush2.bf16.msra.mxu0 0
          %1621 = vmatprep.mubr.bf16.mxu0 0
          %1622 = vmatmul.mubr.bf16.gmra.mxu0 %v1539
          %v1623 = vpop.f32.mrf.mxu0
          %v1624 = vadd.f32 0.0, %v1623
          %v1625 = vpop.f32.mrf.mxu0
          %v1626 = vpop.f32.mrf.mxu0
          %v1627 = vpop.f32.mrf.mxu0
          %1628 = vdwg.mxu0
          %v1629 = vadd.f32 %v1518, %v1624
          %v1630 = vld [vmem:[#allocation8 + $0xc0] sm:$0xf]
          %v1631 = vld [vmem:[#allocation8 + $0xc4] sm:$0xf]
          %v1632 = vld [vmem:[#allocation8 + $0xc8] sm:$0xf]
          %v1633 = vld [vmem:[#allocation8 + $0xcc] sm:$0xf]
          %v1634 = vld [vmem:[#allocation8 + $0xd0] sm:$0xf]
          %v1635 = vld [vmem:[#allocation8 + $0xd4] sm:$0xf]
          %v1636 = vld [vmem:[#allocation8 + $0xd8] sm:$0xf]
          %v1637 = vld [vmem:[#allocation8 + $0xdc] sm:$0xf]
          %v1638 = vld [vmem:[#allocation8 + $0xe0] sm:$0xf]
          %v1639 = vld [vmem:[#allocation8 + $0xe4] sm:$0xf]
          %v1640 = vld [vmem:[#allocation8 + $0xe8] sm:$0xf]
          %v1641 = vld [vmem:[#allocation8 + $0xec] sm:$0xf]
          %v1642 = vld [vmem:[#allocation8 + $0xf0] sm:$0xf]
          %v1643 = vld [vmem:[#allocation8 + $0xf4] sm:$0xf]
          %v1644 = vld [vmem:[#allocation8 + $0xf8] sm:$0xf]
          %v1645 = vld [vmem:[#allocation8 + $0xfc] sm:$0xf]
          %v1646 = vrot.slane %v1311, 3
          %v1664 = vunpack.c.l.b16 %v1630
          %v1665 = vunpack.c.l.b16 %v1631
          %v1666 = vunpack.c.l.b16 %v1632
          %v1667 = vunpack.c.l.b16 %v1633
          %v1668 = vunpack.c.l.b16 %v1634
          %v1669 = vunpack.c.l.b16 %v1635
          %v1670 = vunpack.c.l.b16 %v1636
          %v1671 = vunpack.c.l.b16 %v1637
          %v1672 = vunpack.c.l.b16 %v1638
          %v1673 = vunpack.c.l.b16 %v1639
          %v1674 = vunpack.c.l.b16 %v1640
          %v1675 = vunpack.c.l.b16 %v1641
          %v1676 = vunpack.c.l.b16 %v1642
          %v1677 = vunpack.c.l.b16 %v1643
          %v1678 = vunpack.c.l.b16 %v1644
          %v1679 = vunpack.c.l.b16 %v1645
          %v1680 = vpack.c.b16 %v1665, %v1664
          %v1681 = vpack.c.b16 %v1667, %v1666
          %v1682 = vpack.c.b16 %v1669, %v1668
          %v1683 = vpack.c.b16 %v1671, %v1670
          %v1684 = vpack.c.b16 %v1673, %v1672
          %v1685 = vpack.c.b16 %v1675, %v1674
          %v1686 = vpack.c.b16 %v1677, %v1676
          %v1687 = vpack.c.b16 %v1679, %v1678
          %1696 = vmatprep.subr.bf16.mxu0 0
          %1697 = vmatpush1.bf16.msra.mxu0 %v1687
          %1698 = vmatprep.subr.bf16.mxu0 0
          %1699 = vmatpush1.bf16.msra.mxu0 %v1686
          %1700 = vmatprep.subr.bf16.mxu0 0
          %1701 = vmatpush1.bf16.msra.mxu0 %v1685
          %1702 = vmatprep.subr.bf16.mxu0 0
          %1703 = vmatpush1.bf16.msra.mxu0 %v1684
          %1704 = vmatprep.subr.bf16.mxu0 0
          %1705 = vmatpush1.bf16.msra.mxu0 %v1683
          %1706 = vmatprep.subr.bf16.mxu0 0
          %1707 = vmatpush1.bf16.msra.mxu0 %v1682
          %1708 = vmatprep.subr.bf16.mxu0 0
          %1709 = vmatpush1.bf16.msra.mxu0 %v1681
          %1710 = vmatprep.subr.bf16.mxu0 0
          %1711 = vmatpush1.bf16.msra.mxu0 %v1680
          %1712 = vmatprep.subr.bf16.mxu0 0
          %1713 = vmatpush2.bf16.msra.mxu0 0
          %1714 = vmatprep.subr.bf16.mxu0 0
          %1715 = vmatpush2.bf16.msra.mxu0 0
          %1716 = vmatprep.subr.bf16.mxu0 0
          %1717 = vmatpush2.bf16.msra.mxu0 0
          %1718 = vmatprep.subr.bf16.mxu0 0
          %1719 = vmatpush2.bf16.msra.mxu0 0
          %1720 = vmatprep.subr.bf16.mxu0 0
          %1721 = vmatpush2.bf16.msra.mxu0 0
          %1722 = vmatprep.subr.bf16.mxu0 0
          %1723 = vmatpush2.bf16.msra.mxu0 0
          %1724 = vmatprep.subr.bf16.mxu0 0
          %1725 = vmatpush2.bf16.msra.mxu0 0
          %1726 = vmatprep.subr.bf16.mxu0 0
          %1727 = vmatpush2.bf16.msra.mxu0 0
          %1728 = vmatprep.mubr.bf16.mxu0 0
          %1729 = vmatmul.mubr.bf16.gmra.mxu0 %v1646
          %v1730 = vpop.f32.mrf.mxu0
          %v1731 = vadd.f32 0.0, %v1730
          %v1732 = vpop.f32.mrf.mxu0
          %v1733 = vpop.f32.mrf.mxu0
          %v1734 = vpop.f32.mrf.mxu0
          %1735 = vdwg.mxu0
          %v1736 = vadd.f32 %v1629, %v1731
          %v1737 = vlaneseq
          %v1738 = vshrl.u32 %v1737, 7
          %v1739 = vsub.s32 0, %v1738
          %v1740 = vrot.slane %v1299, %v1739
          %v1741 = vadd.f32 %v1736, %v1740
          %v1742 = vmax.f32 %v1741, 0.0
          %v1743 = vpack.c.bf16 %v1742, %v1742
          %v1744 = vld [vmem:[#allocation11] sm:$0xf]
          %v1745 = vld [vmem:[#allocation11 + $0x4] sm:$0xf]
          %v1746 = vld [vmem:[#allocation11 + $0x8] sm:$0xf]
          %v1747 = vld [vmem:[#allocation11 + $0xc] sm:$0xf]
          %v1748 = vld [vmem:[#allocation11 + $0x10] sm:$0xf]
          %v1749 = vld [vmem:[#allocation11 + $0x14] sm:$0xf]
          %v1750 = vld [vmem:[#allocation11 + $0x18] sm:$0xf]
          %v1751 = vld [vmem:[#allocation11 + $0x1c] sm:$0xf]
          %v1752 = vld [vmem:[#allocation11 + $0x20] sm:$0xf]
          %v1753 = vld [vmem:[#allocation11 + $0x24] sm:$0xf]
          %v1754 = vld [vmem:[#allocation11 + $0x28] sm:$0xf]
          %v1755 = vld [vmem:[#allocation11 + $0x2c] sm:$0xf]
          %v1756 = vld [vmem:[#allocation11 + $0x30] sm:$0xf]
          %v1757 = vld [vmem:[#allocation11 + $0x34] sm:$0xf]
          %v1758 = vld [vmem:[#allocation11 + $0x38] sm:$0xf]
          %v1759 = vld [vmem:[#allocation11 + $0x3c] sm:$0xf]
          %v1760 = vld [vmem:[#allocation9] sm:$0x3]
          %v1761 = vld [vmem:[#allocation12] sm:$0x1f]
          %vm1762 = vcmask 39936
          %v1764 = vsel %vm1762, %v1760, 0
          %vm1766 = vcmask 1044480
          %v1768 = vsel %vm1766, %v1761, 0
          %1770 = vmatprep.subr.mxu0 0.0
          %1771 = vmatpush1.msra.mxu0 0.0
          %1772 = vmatprep.subr.mxu0 0.0
          %1773 = vmatpush1.msra.mxu0 0.0
          %1774 = vmatprep.subr.mxu0 0.0
          %1775 = vmatpush1.msra.mxu0 0.0
          %1776 = vmatprep.subr.mxu0 0.0
          %1777 = vmatpush1.msra.mxu0 0.0
          %1778 = vmatprep.subr.mxu0 0.0
          %1779 = vmatpush1.msra.mxu0 0.0
          %1780 = vmatprep.subr.mxu0 0.0
          %1781 = vmatpush1.msra.mxu0 0.0
          %1782 = vmatprep.subr.mxu0 0.0
          %1783 = vmatpush1.msra.mxu0 0.0
          %1784 = vmatprep.subr.mxu0 0.0
          %1785 = vmatpush1.msra.mxu0 0.0
          %1786 = vmatprep.subr.mxu0 0.0
          %1787 = vmatpush1.msra.mxu0 0.0
          %1788 = vmatprep.subr.mxu0 0.0
          %1789 = vmatpush1.msra.mxu0 0.0
          %1790 = vmatprep.subr.mxu0 0.0
          %1791 = vmatpush1.msra.mxu0 0.0
          %1792 = vmatprep.subr.mxu0 0.0
          %1793 = vmatpush1.msra.mxu0 0.0
          %1794 = vmatprep.subr.mxu0 0.0
          %1795 = vmatpush1.msra.mxu0 0.0
          %1796 = vmatprep.subr.mxu0 0.0
          %1797 = vmatpush1.msra.mxu0 0.0
          %1798 = vmatprep.subr.mxu0 0.0
          %1799 = vmatpush1.msra.mxu0 0.0
          %1800 = vmatprep.subr.mxu0 0.0
          %1801 = vmatpush1.msra.mxu0 %v1768
          %1802 = vmatprep.subr.mxu0 0.0
          %1803 = vmatpush2.msra.mxu0 0.0
          %1804 = vmatprep.subr.mxu0 0.0
          %1805 = vmatpush2.msra.mxu0 0.0
          %1806 = vmatprep.subr.mxu0 0.0
          %1807 = vmatpush2.msra.mxu0 0.0
          %1808 = vmatprep.subr.mxu0 0.0
          %1809 = vmatpush2.msra.mxu0 0.0
          %1810 = vmatprep.subr.mxu0 0.0
          %1811 = vmatpush2.msra.mxu0 0.0
          %1812 = vmatprep.subr.mxu0 0.0
          %1813 = vmatpush2.msra.mxu0 0.0
          %1814 = vmatprep.subr.mxu0 0.0
          %1815 = vmatpush2.msra.mxu0 0.0
          %1816 = vmatprep.subr.mxu0 0.0
          %1817 = vmatpush2.msra.mxu0 0.0
          %1818 = vmatprep.subr.mxu0 0.0
          %1819 = vmatpush2.msra.mxu0 0.0
          %1820 = vmatprep.subr.mxu0 0.0
          %1821 = vmatpush2.msra.mxu0 0.0
          %1822 = vmatprep.subr.mxu0 0.0
          %1823 = vmatpush2.msra.mxu0 0.0
          %1824 = vmatprep.subr.mxu0 0.0
          %1825 = vmatpush2.msra.mxu0 0.0
          %1826 = vmatprep.subr.mxu0 0.0
          %1827 = vmatpush2.msra.mxu0 0.0
          %1828 = vmatprep.subr.mxu0 0.0
          %1829 = vmatpush2.msra.mxu0 0.0
          %1830 = vmatprep.subr.mxu0 0.0
          %1831 = vmatpush2.msra.mxu0 0.0
          %1832 = vmatprep.subr.mxu0 0.0
          %1833 = vmatpush2.msra.mxu0 0.0
          %1834 = vmatprep.mubr.f32.mxu0 0.0
          %1835 = vmatmul.mubr.f32.gmra.mxu0 %v1764
          %v1836 = vpop.f32.mrf.mxu0
          %v1837 = vadd.f32 0.0, %v1836
          %v1838 = vpop.f32.mrf.mxu0
          %1839 = vdwg.mxu0
          %v1856 = vunpack.c.l.b16 %v1744
          %v1857 = vunpack.c.l.b16 %v1745
          %v1858 = vunpack.c.l.b16 %v1746
          %v1859 = vunpack.c.l.b16 %v1747
          %v1860 = vunpack.c.l.b16 %v1748
          %v1861 = vunpack.c.l.b16 %v1749
          %v1862 = vunpack.c.l.b16 %v1750
          %v1863 = vunpack.c.l.b16 %v1751
          %v1864 = vunpack.c.l.b16 %v1752
          %v1865 = vunpack.c.l.b16 %v1753
          %v1866 = vunpack.c.l.b16 %v1754
          %v1867 = vunpack.c.l.b16 %v1755
          %v1868 = vunpack.c.l.b16 %v1756
          %v1869 = vunpack.c.l.b16 %v1757
          %v1870 = vunpack.c.l.b16 %v1758
          %v1871 = vunpack.c.l.b16 %v1759
          %v1872 = vpack.c.b16 %v1857, %v1856
          %v1873 = vpack.c.b16 %v1859, %v1858
          %v1874 = vpack.c.b16 %v1861, %v1860
          %v1875 = vpack.c.b16 %v1863, %v1862
          %v1876 = vpack.c.b16 %v1865, %v1864
          %v1877 = vpack.c.b16 %v1867, %v1866
          %v1878 = vpack.c.b16 %v1869, %v1868
          %v1879 = vpack.c.b16 %v1871, %v1870
          %1888 = vmatprep.subr.bf16.mxu0 0
          %1889 = vmatpush1.bf16.msra.mxu0 %v1879
          %1890 = vmatprep.subr.bf16.mxu0 0
          %1891 = vmatpush1.bf16.msra.mxu0 %v1878
          %1892 = vmatprep.subr.bf16.mxu0 0
          %1893 = vmatpush1.bf16.msra.mxu0 %v1877
          %1894 = vmatprep.subr.bf16.mxu0 0
          %1895 = vmatpush1.bf16.msra.mxu0 %v1876
          %1896 = vmatprep.subr.bf16.mxu0 0
          %1897 = vmatpush1.bf16.msra.mxu0 %v1875
          %1898 = vmatprep.subr.bf16.mxu0 0
          %1899 = vmatpush1.bf16.msra.mxu0 %v1874
          %1900 = vmatprep.subr.bf16.mxu0 0
          %1901 = vmatpush1.bf16.msra.mxu0 %v1873
          %1902 = vmatprep.subr.bf16.mxu0 0
          %1903 = vmatpush1.bf16.msra.mxu0 %v1872
          %1904 = vmatprep.subr.bf16.mxu0 0
          %1905 = vmatpush2.bf16.msra.mxu0 0
          %1906 = vmatprep.subr.bf16.mxu0 0
          %1907 = vmatpush2.bf16.msra.mxu0 0
          %1908 = vmatprep.subr.bf16.mxu0 0
          %1909 = vmatpush2.bf16.msra.mxu0 0
          %1910 = vmatprep.subr.bf16.mxu0 0
          %1911 = vmatpush2.bf16.msra.mxu0 0
          %1912 = vmatprep.subr.bf16.mxu0 0
          %1913 = vmatpush2.bf16.msra.mxu0 0
          %1914 = vmatprep.subr.bf16.mxu0 0
          %1915 = vmatpush2.bf16.msra.mxu0 0
          %1916 = vmatprep.subr.bf16.mxu0 0
          %1917 = vmatpush2.bf16.msra.mxu0 0
          %1918 = vmatprep.subr.bf16.mxu0 0
          %1919 = vmatpush2.bf16.msra.mxu0 0
          %1920 = vmatprep.mubr.bf16.mxu0 0
          %1921 = vmatmul.mubr.bf16.gmra.mxu0 %v1743
          %v1922 = vpop.f32.mrf.mxu0
          %v1923 = vadd.f32 %v1837, %v1922
          %v1924 = vpop.f32.mrf.mxu0
          %v1925 = vpop.f32.mrf.mxu0
          %v1926 = vpop.f32.mrf.mxu0
          %1927 = vdwg.mxu0
          %v1928 = vlaneseq
          %v1929 = vshrl.u32 %v1928, 7
          %v1930 = vsub.s32 0, %v1929
          %v1931 = vrot.slane %v1300, %v1930
          %v1932 = vadd.f32 %v1923, %v1931
          %v1933 = vmax.f32 %v1932, 0.0
          %v1934 = vpack.c.bf16 %v1933, %v1933
          %v1935 = vld [vmem:[%s6] sm:$0xf]
          %v1936 = vld [vmem:[%s6 + $0x4] sm:$0xf]
          %v1937 = vld [vmem:[%s6 + $0x8] sm:$0xf]
          %v1938 = vld [vmem:[%s6 + $0xc] sm:$0xf]
          %v1939 = vld [vmem:[%s6 + $0x10] sm:$0xf]
          %v1940 = vld [vmem:[%s6 + $0x14] sm:$0xf]
          %v1941 = vld [vmem:[%s6 + $0x18] sm:$0xf]
          %v1942 = vld [vmem:[%s6 + $0x1c] sm:$0xf]
          %v1943 = vld [vmem:[%s6 + $0x20] sm:$0xf]
          %v1944 = vld [vmem:[%s6 + $0x24] sm:$0xf]
          %v1945 = vld [vmem:[%s6 + $0x28] sm:$0xf]
          %v1946 = vld [vmem:[%s6 + $0x2c] sm:$0xf]
          %v1947 = vld [vmem:[%s6 + $0x30] sm:$0xf]
          %v1948 = vld [vmem:[%s6 + $0x34] sm:$0xf]
          %v1949 = vld [vmem:[%s6 + $0x38] sm:$0xf]
          %v1950 = vld [vmem:[%s6 + $0x3c] sm:$0xf]
          %v1951 = vlaneseq
          %v1952 = vshrl.u32 %v1951, 7
          %v1953 = vsub.s32 0, %v1952
          %v1954 = vrot.slane %v1301, %v1953
          %v1971 = vunpack.c.l.b16 %v1935
          %v1972 = vunpack.c.l.b16 %v1936
          %v1973 = vunpack.c.l.b16 %v1937
          %v1974 = vunpack.c.l.b16 %v1938
          %v1975 = vunpack.c.l.b16 %v1939
          %v1976 = vunpack.c.l.b16 %v1940
          %v1977 = vunpack.c.l.b16 %v1941
          %v1978 = vunpack.c.l.b16 %v1942
          %v1979 = vunpack.c.l.b16 %v1943
          %v1980 = vunpack.c.l.b16 %v1944
          %v1981 = vunpack.c.l.b16 %v1945
          %v1982 = vunpack.c.l.b16 %v1946
          %v1983 = vunpack.c.l.b16 %v1947
          %v1984 = vunpack.c.l.b16 %v1948
          %v1985 = vunpack.c.l.b16 %v1949
          %v1986 = vunpack.c.l.b16 %v1950
          %v1987 = vpack.c.b16 %v1972, %v1971
          %v1988 = vpack.c.b16 %v1974, %v1973
          %v1989 = vpack.c.b16 %v1976, %v1975
          %v1990 = vpack.c.b16 %v1978, %v1977
          %v1991 = vpack.c.b16 %v1980, %v1979
          %v1992 = vpack.c.b16 %v1982, %v1981
          %v1993 = vpack.c.b16 %v1984, %v1983
          %v1994 = vpack.c.b16 %v1986, %v1985
          %2003 = vmatprep.subr.bf16.mxu0 0
          %2004 = vmatpush1.bf16.msra.mxu0 %v1994
          %2005 = vmatprep.subr.bf16.mxu0 0
          %2006 = vmatpush1.bf16.msra.mxu0 %v1993
          %2007 = vmatprep.subr.bf16.mxu0 0
          %2008 = vmatpush1.bf16.msra.mxu0 %v1992
          %2009 = vmatprep.subr.bf16.mxu0 0
          %2010 = vmatpush1.bf16.msra.mxu0 %v1991
          %2011 = vmatprep.subr.bf16.mxu0 0
          %2012 = vmatpush1.bf16.msra.mxu0 %v1990
          %2013 = vmatprep.subr.bf16.mxu0 0
          %2014 = vmatpush1.bf16.msra.mxu0 %v1989
          %2015 = vmatprep.subr.bf16.mxu0 0
          %2016 = vmatpush1.bf16.msra.mxu0 %v1988
          %2017 = vmatprep.subr.bf16.mxu0 0
          %2018 = vmatpush1.bf16.msra.mxu0 %v1987
          %2019 = vmatprep.subr.bf16.mxu0 0
          %2020 = vmatpush2.bf16.msra.mxu0 0
          %2021 = vmatprep.subr.bf16.mxu0 0
          %2022 = vmatpush2.bf16.msra.mxu0 0
          %2023 = vmatprep.subr.bf16.mxu0 0
          %2024 = vmatpush2.bf16.msra.mxu0 0
          %2025 = vmatprep.subr.bf16.mxu0 0
          %2026 = vmatpush2.bf16.msra.mxu0 0
          %2027 = vmatprep.subr.bf16.mxu0 0
          %2028 = vmatpush2.bf16.msra.mxu0 0
          %2029 = vmatprep.subr.bf16.mxu0 0
          %2030 = vmatpush2.bf16.msra.mxu0 0
          %2031 = vmatprep.subr.bf16.mxu0 0
          %2032 = vmatpush2.bf16.msra.mxu0 0
          %2033 = vmatprep.subr.bf16.mxu0 0
          %2034 = vmatpush2.bf16.msra.mxu0 0
          %2035 = vmatprep.mubr.bf16.mxu0 0
          %2036 = vmatmul.mubr.bf16.gmra.mxu0 %v1934
          %v2037 = vpop.f32.mrf.mxu0
          %v2038 = vadd.f32 %v1954, %v2037
          %v2039 = vpop.f32.mrf.mxu0
          %v2040 = vpop.f32.mrf.mxu0
          %v2041 = vpop.f32.mrf.mxu0
          %2042 = vdwg.mxu0
          %v2043 = vmax.f32 %v2038, 0.0
          %v2044 = vpack.c.bf16 %v2043, %v2043
          %v2045 = vld [vmem:[%s7] sm:$0xf]
          %v2046 = vld [vmem:[%s7 + $0x4] sm:$0xf]
          %v2047 = vld [vmem:[%s7 + $0x8] sm:$0xf]
          %v2048 = vld [vmem:[%s7 + $0xc] sm:$0xf]
          %v2049 = vld [vmem:[%s7 + $0x10] sm:$0xf]
          %v2050 = vld [vmem:[%s7 + $0x14] sm:$0xf]
          %v2051 = vld [vmem:[%s7 + $0x18] sm:$0xf]
          %v2052 = vld [vmem:[%s7 + $0x1c] sm:$0xf]
          %v2053 = vlaneseq
          %v2054 = vshrl.u32 %v2053, 7
          %v2055 = vsub.s32 0, %v2054
          %v2056 = vrot.slane %v1302, %v2055
          %v2065 = vunpack.c.l.b16 %v2045
          %v2066 = vunpack.c.l.b16 %v2046
          %v2067 = vunpack.c.l.b16 %v2047
          %v2068 = vunpack.c.l.b16 %v2048
          %v2069 = vunpack.c.l.b16 %v2049
          %v2070 = vunpack.c.l.b16 %v2050
          %v2071 = vunpack.c.l.b16 %v2051
          %v2072 = vunpack.c.l.b16 %v2052
          %v2073 = vpack.c.b16 %v2066, %v2065
          %v2074 = vpack.c.b16 %v2068, %v2067
          %v2075 = vpack.c.b16 %v2070, %v2069
          %v2076 = vpack.c.b16 %v2072, %v2071
          %vm2081 = vcmask 523264
          %v2083 = vsel %vm2081, %v2044, 0
          %2085 = vmatprep.subr.bf16.mxu0 0
          %2086 = vmatpush1.bf16.msra.mxu0 0
          %2087 = vmatprep.subr.bf16.mxu0 0
          %2088 = vmatpush1.bf16.msra.mxu0 0
          %2089 = vmatprep.subr.bf16.mxu0 0
          %2090 = vmatpush1.bf16.msra.mxu0 0
          %2091 = vmatprep.subr.bf16.mxu0 0
          %2092 = vmatpush1.bf16.msra.mxu0 0
          %2093 = vmatprep.subr.bf16.mxu0 0
          %2094 = vmatpush1.bf16.msra.mxu0 %v2076
          %2095 = vmatprep.subr.bf16.mxu0 0
          %2096 = vmatpush1.bf16.msra.mxu0 %v2075
          %2097 = vmatprep.subr.bf16.mxu0 0
          %2098 = vmatpush1.bf16.msra.mxu0 %v2074
          %2099 = vmatprep.subr.bf16.mxu0 0
          %2100 = vmatpush1.bf16.msra.mxu0 %v2073
          %2101 = vmatprep.subr.bf16.mxu0 0
          %2102 = vmatpush2.bf16.msra.mxu0 0
          %2103 = vmatprep.subr.bf16.mxu0 0
          %2104 = vmatpush2.bf16.msra.mxu0 0
          %2105 = vmatprep.subr.bf16.mxu0 0
          %2106 = vmatpush2.bf16.msra.mxu0 0
          %2107 = vmatprep.subr.bf16.mxu0 0
          %2108 = vmatpush2.bf16.msra.mxu0 0
          %2109 = vmatprep.subr.bf16.mxu0 0
          %2110 = vmatpush2.bf16.msra.mxu0 0
          %2111 = vmatprep.subr.bf16.mxu0 0
          %2112 = vmatpush2.bf16.msra.mxu0 0
          %2113 = vmatprep.subr.bf16.mxu0 0
          %2114 = vmatpush2.bf16.msra.mxu0 0
          %2115 = vmatprep.subr.bf16.mxu0 0
          %2116 = vmatpush2.bf16.msra.mxu0 0
          %2117 = vmatprep.mubr.bf16.mxu0 0
          %2118 = vmatmul.mubr.bf16.gmra.mxu0 %v2083
          %v2119 = vpop.f32.mrf.mxu0
          %v2120 = vadd.f32 %v2056, %v2119
          %v2121 = vpop.f32.mrf.mxu0
          %v2122 = vpop.f32.mrf.mxu0
          %v2123 = vpop.f32.mrf.mxu0
          %2124 = vdwg.mxu0
          %v2125 = vmax.f32 %v2120, 0.0
          %v2126 = vpack.c.bf16 %v2125, %v2125
          %v2127 = vld [vmem:[%s8] sm:$0xf]
          %v2128 = vld [vmem:[%s8 + $0x4] sm:$0xf]
          %v2129 = vld [vmem:[%s8 + $0x8] sm:$0xf]
          %v2130 = vld [vmem:[%s8 + $0xc] sm:$0xf]
          %v2131 = vlaneseq
          %v2132 = vshrl.u32 %v2131, 7
          %v2133 = vsub.s32 0, %v2132
          %v2134 = vrot.slane %v1303, %v2133
          %v2139 = vunpack.c.l.b16 %v2127
          %v2140 = vunpack.c.l.b16 %v2128
          %v2141 = vunpack.c.l.b16 %v2129
          %v2142 = vunpack.c.l.b16 %v2130
          %v2143 = vpack.c.b16 %v2140, %v2139
          %v2144 = vpack.c.b16 %v2142, %v2141
          %vm2147 = vcmask 261120
          %v2149 = vsel %vm2147, %v2126, 0
          %2151 = vmatprep.subr.bf16.mxu0 0
          %2152 = vmatpush1.bf16.msra.mxu0 0
          %2153 = vmatprep.subr.bf16.mxu0 0
          %2154 = vmatpush1.bf16.msra.mxu0 0
          %2155 = vmatprep.subr.bf16.mxu0 0
          %2156 = vmatpush1.bf16.msra.mxu0 0
          %2157 = vmatprep.subr.bf16.mxu0 0
          %2158 = vmatpush1.bf16.msra.mxu0 0
          %2159 = vmatprep.subr.bf16.mxu0 0
          %2160 = vmatpush1.bf16.msra.mxu0 0
          %2161 = vmatprep.subr.bf16.mxu0 0
          %2162 = vmatpush1.bf16.msra.mxu0 0
          %2163 = vmatprep.subr.bf16.mxu0 0
          %2164 = vmatpush1.bf16.msra.mxu0 %v2144
          %2165 = vmatprep.subr.bf16.mxu0 0
          %2166 = vmatpush1.bf16.msra.mxu0 %v2143
          %2167 = vmatprep.subr.bf16.mxu0 0
          %2168 = vmatpush2.bf16.msra.mxu0 0
          %2169 = vmatprep.subr.bf16.mxu0 0
          %2170 = vmatpush2.bf16.msra.mxu0 0
          %2171 = vmatprep.subr.bf16.mxu0 0
          %2172 = vmatpush2.bf16.msra.mxu0 0
          %2173 = vmatprep.subr.bf16.mxu0 0
          %2174 = vmatpush2.bf16.msra.mxu0 0
          %2175 = vmatprep.subr.bf16.mxu0 0
          %2176 = vmatpush2.bf16.msra.mxu0 0
          %2177 = vmatprep.subr.bf16.mxu0 0
          %2178 = vmatpush2.bf16.msra.mxu0 0
          %2179 = vmatprep.subr.bf16.mxu0 0
          %2180 = vmatpush2.bf16.msra.mxu0 0
          %2181 = vmatprep.subr.bf16.mxu0 0
          %2182 = vmatpush2.bf16.msra.mxu0 0
          %2183 = vmatprep.mubr.bf16.mxu0 0
          %2184 = vmatmul.mubr.bf16.gmra.mxu0 %v2149
          %v2185 = vpop.f32.mrf.mxu0
          %v2186 = vadd.f32 %v2134, %v2185
          %v2187 = vpop.f32.mrf.mxu0
          %v2188 = vpop.f32.mrf.mxu0
          %v2189 = vpop.f32.mrf.mxu0
          %2190 = vdwg.mxu0
          %vm2191 = vcmask 41984
          %2192 = vst.msk [vmem:[#allocation15] sm:$0x3] %vm2191, %v2186
        $region96: #{tpu_custom_call.1} parent=59 // pred_fallthru
          _
        // Predicated region
        $region97: #{tpu_custom_call.1} parent=59 // pred_check
          %p2193 = pneg %p263
        $region98: #{tpu_custom_call.1} parent=59 // pred_check_branch
          %2195 = sbr.rel (%p2193) target = $region100
        $region99: #{tpu_custom_call.1} parent=59 // pred_region
          %s2197 = ssub.s32 32, 32
          %2198 = vsyncadd [#allocation5], %s2197
          %s2200 = sshll.u32 [#allocation15], 4
          %s2201 = int_to_ptr.vmem [resolvable:$true] %s2200
          %2203 = dma.vmem_to_hbm [thread:$0]  %s2201, 32, %s10, [#allocation5]
        $region100: #{tpu_custom_call.1} parent=59 // pred_fallthru
          _
        // Predicated region
        $region101: #{tpu_custom_call.1} parent=59 // pred_check
          %p2204 = pneg %p263
        $region102: #{tpu_custom_call.1} parent=59 // pred_check_branch
          %2206 = sbr.rel (%p2204) target = $region104
        $region103: #{tpu_custom_call.1} parent=59 // pred_region
          %2207 = dma.done [#allocation5], 32
        $region104: #{tpu_custom_call.1} parent=59 // pred_fallthru
          _
      $region60: #{tpu_custom_call.1} parent=5 // pred_fallthru
        _
      %p2208 = scmp.le.s32.totalorder 2, %s25
      // Predicated region
      $region105: #{tpu_custom_call.1} parent=5 // pred_check
        %p2209 = pneg %p2208
      $region106: #{tpu_custom_call.1} parent=5 // pred_check_branch
        %2211 = sbr.rel (%p2209) target = $region108
      $region107: #{tpu_custom_call.1} parent=5 // pred_region
        %s2212 = ssub.s32 %s25, 2
      $region108: #{tpu_custom_call.1} parent=5 // pred_fallthru
        _
    $region6: #{tpu_custom_call.1} parent=1 // loop_footer
      %s29 = sadd.s32 1, %s25
    $region7: #{tpu_custom_call.1} parent=1 // loop_footer_branch
      %24 = sbr.rel target = $region3
    $region8: #{tpu_custom_call.1} parent=1 // loop_exit
      _
    %2213 = vsyncpa [#allocation4], 1
    %s2214 = scalar_lea.sflag [#allocation4], 1
    %2215 = vsyncpa %s2214, 1
    %2216 = vsyncpa [#allocation7], 1
    %s2217 = scalar_lea.sflag [#allocation7], 1
    %2218 = vsyncpa %s2217, 1
    %2219 = vsyncpa [#allocation10], 1
    %2220 = vsyncpa [#allocation13], 1
    %2221 = vsyncpa [#allocation5], 1
    %s2222 = scalar_lea.sflag [#allocation5], 1
    %2223 = vsyncpa %s2222, 1

</llo_original>
